<compile_context>
chip_gen: v6e
topology: v6e:2x2x1
jax: 0.10.0
libtpu: 0.0.40
codegen_flags: <defaults>
</compile_context>

<pallas_src>
import math

import jax
import jax.numpy as jnp
from jax.experimental import pallas as pl
from jax.experimental.pallas import tpu as pltpu

LN_EPS = 1e-5            # torch.nn.LayerNorm default eps
MSG_EPS = 1e-7           # GENConv eps added to relu(message)
SOFTMAX_DENOM_EPS = 1e-16  # PyG softmax denominator epsilon


def _layer_norm(x, gamma, beta):
    mu = jnp.mean(x, axis=-1, keepdims=True)
    var = jnp.mean(jnp.square(x - mu), axis=-1, keepdims=True)
    return (x - mu) * jax.lax.rsqrt(var + LN_EPS) * gamma + beta


def aigmae_block_kernel(x_ref, ssrc_ref, sdst_ref, sdstT_ref,
                        ln1_g_ref, ln1_b_ref, t_ref,
                        w1_ref, b1_ref, ln2_g_ref, ln2_b_ref,
                        w2_ref, b2_ref, out_ref):
    """One graph of the AIGMAEBlock forward.

    x_ref    : (1, N, H)   node features of this graph
    ssrc_ref : (1, E, N)   one-hot source-gather operator  (S[e, src_e] = 1)
    sdst_ref : (1, E, N)   one-hot dest-gather operator    (D[e, dst_e] = 1)
    sdstT_ref: (1, N, E)   its transpose (scatter-sum operator)
    ln1_*    : (1, H)      DeepGCNLayer pre-norm affine params
    t_ref    : (1, 1)      learnable softmax-aggregation temperature
    w1_ref   : (H, 2H)     GENConv MLP linear 1, pre-transposed for x @ W
    b1_ref   : (1, 2H)
    ln2_*    : (1, 2H)     GENConv MLP LayerNorm affine params
    w2_ref   : (2H, H)     GENConv MLP linear 2, pre-transposed
    b2_ref   : (1, H)
    out_ref  : (1, N, H)
    """
    x = x_ref[0]          # (N, H)
    ssrc = ssrc_ref[0]    # (E, N)
    sdst = sdst_ref[0]    # (E, N)
    sdstT = sdstT_ref[0]  # (N, E)

    # DeepGCNLayer 'res+' pre-norm (act=None, dropout p=0 -> no-ops).
    h = _layer_norm(x, ln1_g_ref[...], ln1_b_ref[...])              # (N, H)

    # GENConv message: gather source node features (one MXU matmul), relu + eps.
    msg = jnp.maximum(
        jnp.dot(ssrc, h, preferred_element_type=jnp.float32), 0.0) + MSG_EPS   # (E, H)

    # Softmax aggregation over incoming edges, per destination node & channel.
    # Messages are relu(LayerNorm(..)) + eps, i.e. bounded, so the unstabilised exp
    # is safe (mathematically identical to PyG's max-subtracted scatter_softmax).
    numer = jnp.exp(msg * t_ref[...])                                           # (E, H)
    denom_node = jnp.dot(sdstT, numer,
                         preferred_element_type=jnp.float32) + SOFTMAX_DENOM_EPS  # (N, H)
    denom_edge = jnp.dot(sdst, denom_node,
                         preferred_element_type=jnp.float32)                    # (E, H)
    alpha = numer / denom_edge
    agg = jnp.dot(sdstT, alpha * msg,
                  preferred_element_type=jnp.float32)                           # (N, H)

    # GENConv residual with destination features.
    o = agg + h

    # GENConv MLP: Linear(H,2H) -> LayerNorm(2H) -> ReLU -> Linear(2H,H).
    z = jnp.dot(o, w1_ref[...], preferred_element_type=jnp.float32) + b1_ref[...]
    z = _layer_norm(z, ln2_g_ref[...], ln2_b_ref[...])
    z = jnp.maximum(z, 0.0)
    z = jnp.dot(z, w2_ref[...], preferred_element_type=jnp.float32) + b2_ref[...]

    # DeepGCNLayer 'res+' residual.
    out_ref[0] = (x + z).astype(out_ref.dtype)


def aigmae_block(input_nodes, input_edges, params, padding_mask=None):
    """Pallas implementation of AIGMAEBlock.forward(input_nodes, input_edges, padding_mask).

    input_nodes: (B, N, H) float32
    input_edges: (B, 2, E) int32   -- row 0: source node ids, row 1: destination node ids
    """
    ln1_g, ln1_b, t, W1, b1, ln2_g, ln2_b, W2, b2 = params
    B, N, H = input_nodes.shape
    E = input_edges.shape[-1]
    H2 = 2 * H

    # Plain-JAX glue: turn the data-dependent edge gather/scatter into dense one-hot
    # operators so the kernel body is pure MXU matmuls (no dynamic indexing in-kernel).
    src = input_edges[:, 0, :]                               # (B, E)
    dst = input_edges[:, 1, :]                               # (B, E)
    ssrc = jax.nn.one_hot(src, N, dtype=jnp.float32)         # (B, E, N)
    sdst = jax.nn.one_hot(dst, N, dtype=jnp.float32)         # (B, E, N)
    sdstT = jnp.swapaxes(sdst, 1, 2)                         # (B, N, E)

    # Pre-transpose weights for x @ W; reshape 1-D params to lane-major (1, F).
    w1t = W1.T                                               # (H, 2H)
    w2t = W2.T                                               # (2H, H)
    b1r = b1.reshape(1, H2)
    b2r = b2.reshape(1, H)
    ln1_gr = ln1_g.reshape(1, H)
    ln1_br = ln1_b.reshape(1, H)
    ln2_gr = ln2_g.reshape(1, H2)
    ln2_br = ln2_b.reshape(1, H2)
    t_r = jnp.asarray(t, jnp.float32).reshape(1, 1)

    const = lambda b: (0, 0)   # constant index map -> weights fetched once

    out = pl.pallas_call(
        aigmae_block_kernel,
        out_shape=jax.ShapeDtypeStruct((B, N, H), jnp.float32),
        grid=(B,),
        in_specs=[
            pl.BlockSpec((1, N, H), lambda b: (b, 0, 0)),    # node features, per graph
            pl.BlockSpec((1, E, N), lambda b: (b, 0, 0)),    # src one-hot
            pl.BlockSpec((1, E, N), lambda b: (b, 0, 0)),    # dst one-hot
            pl.BlockSpec((1, N, E), lambda b: (b, 0, 0)),    # dst one-hot transposed
            pl.BlockSpec((1, H), const),                     # LayerNorm-1 gamma
            pl.BlockSpec((1, H), const),                     # LayerNorm-1 beta
            pl.BlockSpec((1, 1), const),                     # softmax temperature t
            pl.BlockSpec((H, H2), const),                    # MLP W1^T
            pl.BlockSpec((1, H2), const),                    # MLP b1
            pl.BlockSpec((1, H2), const),                    # LayerNorm-2 gamma
            pl.BlockSpec((1, H2), const),                    # LayerNorm-2 beta
            pl.BlockSpec((H2, H), const),                    # MLP W2^T
            pl.BlockSpec((1, H), const),                     # MLP b2
        ],
        out_specs=pl.BlockSpec((1, N, H), lambda b: (b, 0, 0)),
        compiler_params=pltpu.CompilerParams(
            dimension_semantics=("parallel",)),              # graphs are independent
    )(input_nodes, ssrc, sdst, sdstT,
      ln1_gr, ln1_br, t_r, w1t, b1r, ln2_gr, ln2_br, w2t, b2r)

    if padding_mask is not None:
        out = out * padding_mask[..., None].astype(out.dtype)
    return out


def reference_forward(input_nodes, input_edges, params, padding_mask=None):
    """Pure-JAX transliteration of the PyTorch AIGMAEBlock forward."""
    ln1_g, ln1_b, t, W1, b1, ln2_g, ln2_b, W2, b2 = params
    B, N, H = input_nodes.shape
    outs = []
    for i in range(B):
        x = input_nodes[i]                         # (N, H)
        src = input_edges[i, 0]                    # (E,)
        dst = input_edges[i, 1]                    # (E,)
        # DeepGCNLayer 'res+': pre-norm, (act=None, dropout=0), conv, residual.
        h = _layer_norm(x, ln1_g, ln1_b)
        # GENConv message + scatter-softmax aggregation (faithful, max-stabilised).
        msg = jax.nn.relu(h[src]) + MSG_EPS        # (E, H)
        scaled = msg * t
        gmax = jax.ops.segment_max(scaled, dst, num_segments=N)
        e = jnp.exp(scaled - gmax[dst])
        denom = jax.ops.segment_sum(e, dst, num_segments=N) + SOFTMAX_DENOM_EPS
        alpha = e / denom[dst]
        agg = jax.ops.segment_sum(alpha * msg, dst, num_segments=N)   # (N, H)
        o = agg + h
        # GENConv MLP.
        z = o @ W1.T + b1
        z = _layer_norm(z, ln2_g, ln2_b)
        z = jax.nn.relu(z)
        z = z @ W2.T + b2
        outs.append(x + z)
    out = jnp.stack(outs, axis=0)
    if padding_mask is not None:
        out = out * padding_mask[..., None]
    return out


if __name__ == "__main__":
    # Small config: 2 graphs, 16 nodes, 32 edges, hidden_size 32.
    B, N, E = 2, 16, 32
    HIDDEN = 32

    key = jax.random.PRNGKey(0)
    ks = jax.random.split(key, 10)

    input_nodes = jax.random.normal(ks[0], (B, N, HIDDEN), dtype=jnp.float32)
    input_edges = jax.random.randint(ks[1], (B, 2, E), 0, N, dtype=jnp.int32)

    def init_linear(kw, kb, out_f, in_f):
        bound = 1.0 / math.sqrt(in_f)
        w = jax.random.uniform(kw, (out_f, in_f), jnp.float32, -bound, bound)
        b = jax.random.uniform(kb, (out_f,), jnp.float32, -bound, bound)
        return w, b

    # Parameters (PyTorch nn.Linear shapes: W (out, in), b (out,)); LayerNorm affines
    # perturbed away from (1, 0) so the affine path is actually exercised.
    ln1_g = 1.0 + 0.1 * jax.random.normal(ks[2], (HIDDEN,), jnp.float32)
    ln1_b = 0.05 * jax.random.normal(ks[3], (HIDDEN,), jnp.float32)
    t = jnp.float32(1.25)                                   # learnable temperature (init 1.0)
    W1, b1 = init_linear(ks[4], ks[5], 2 * HIDDEN, HIDDEN)  # GENConv MLP linear 1
    ln2_g = 1.0 + 0.1 * jax.random.normal(ks[6], (2 * HIDDEN,), jnp.float32)
    ln2_b = 0.05 * jax.random.normal(ks[7], (2 * HIDDEN,), jnp.float32)
    W2, b2 = init_linear(ks[8], ks[9], HIDDEN, 2 * HIDDEN)  # GENConv MLP linear 2

    params = (ln1_g, ln1_b, t, W1, b1, ln2_g, ln2_b, W2, b2)

    out = aigmae_block(input_nodes, input_edges, params, padding_mask=None)
    out = jax.block_until_ready(out)

    ref = reference_forward(input_nodes, input_edges, params, padding_mask=None)
    assert out.shape == (B, N, HIDDEN)
    max_diff = jnp.max(jnp.abs(out - ref))
    assert jnp.allclose(out, ref, atol=1e-4, rtol=1e-4), f"max abs diff = {max_diff}"

    print("KERNEL_OK")
</pallas_src>

<mosaic_0001>
module attributes {stable_mosaic.version = 11 : i64} {
  func.func @aigmae_block_kernel(%arg0: i32, %arg1: memref<1x16x32xf32, #tpu.memory_space<vmem>>, %arg2: memref<1x32x16xf32, #tpu.memory_space<vmem>>, %arg3: memref<1x32x16xf32, #tpu.memory_space<vmem>>, %arg4: memref<1x16x32xf32, #tpu.memory_space<vmem>>, %arg5: memref<1x32xf32, #tpu.memory_space<vmem>>, %arg6: memref<1x32xf32, #tpu.memory_space<vmem>>, %arg7: memref<1x1xf32, #tpu.memory_space<vmem>>, %arg8: memref<32x64xf32, #tpu.memory_space<vmem>>, %arg9: memref<1x64xf32, #tpu.memory_space<vmem>>, %arg10: memref<1x64xf32, #tpu.memory_space<vmem>>, %arg11: memref<1x64xf32, #tpu.memory_space<vmem>>, %arg12: memref<64x32xf32, #tpu.memory_space<vmem>>, %arg13: memref<1x32xf32, #tpu.memory_space<vmem>>, %arg14: memref<1x16x32xf32, #tpu.memory_space<vmem>>) attributes {dimension_semantics = [#tpu.dimension_semantics<parallel>], iteration_bounds = array<i64: 2>, scalar_prefetch = 0 : i64, scratch_operands = 0 : i64, tpu.core_type = #tpu.core_type<tc>, window_params = [{transform_indices = @transform_0, window_bounds = array<i64: 1, 16, 32>}, {transform_indices = @transform_1, window_bounds = array<i64: 1, 32, 16>}, {transform_indices = @transform_2, window_bounds = array<i64: 1, 32, 16>}, {transform_indices = @transform_3, window_bounds = array<i64: 1, 16, 32>}, {pipeline_mode = #tpu.pipeline_mode<synchronous>, transform_indices = @transform_4, window_bounds = array<i64: 1, 32>}, {pipeline_mode = #tpu.pipeline_mode<synchronous>, transform_indices = @transform_5, window_bounds = array<i64: 1, 32>}, {pipeline_mode = #tpu.pipeline_mode<synchronous>, transform_indices = @transform_6, window_bounds = array<i64: 1, 1>}, {pipeline_mode = #tpu.pipeline_mode<synchronous>, transform_indices = @transform_7, window_bounds = array<i64: 32, 64>}, {pipeline_mode = #tpu.pipeline_mode<synchronous>, transform_indices = @transform_8, window_bounds = array<i64: 1, 64>}, {pipeline_mode = #tpu.pipeline_mode<synchronous>, transform_indices = @transform_9, window_bounds = array<i64: 1, 64>}, {pipeline_mode = #tpu.pipeline_mode<synchronous>, transform_indices = @transform_10, window_bounds = array<i64: 1, 64>}, {pipeline_mode = #tpu.pipeline_mode<synchronous>, transform_indices = @transform_11, window_bounds = array<i64: 64, 32>}, {pipeline_mode = #tpu.pipeline_mode<synchronous>, transform_indices = @transform_12, window_bounds = array<i64: 1, 32>}, {transform_indices = @transform_13, window_bounds = array<i64: 1, 16, 32>}]} {
    %c0 = arith.constant 0 : index
    %c0_0 = arith.constant 0 : index
    %c0_1 = arith.constant 0 : index
    %0 = vector.load %arg1[%c0, %c0_0, %c0_1] : memref<1x16x32xf32, #tpu.memory_space<vmem>>, vector<1x16x32xf32>
    %1 = vector.shape_cast %0 : vector<1x16x32xf32> to vector<16x32xf32>
    %c0_2 = arith.constant 0 : index
    %c0_3 = arith.constant 0 : index
    %c0_4 = arith.constant 0 : index
    %2 = vector.load %arg2[%c0_2, %c0_3, %c0_4] : memref<1x32x16xf32, #tpu.memory_space<vmem>>, vector<1x32x16xf32>
    %3 = vector.shape_cast %2 : vector<1x32x16xf32> to vector<32x16xf32>
    %c0_5 = arith.constant 0 : index
    %c0_6 = arith.constant 0 : index
    %c0_7 = arith.constant 0 : index
    %4 = vector.load %arg3[%c0_5, %c0_6, %c0_7] : memref<1x32x16xf32, #tpu.memory_space<vmem>>, vector<1x32x16xf32>
    %5 = vector.shape_cast %4 : vector<1x32x16xf32> to vector<32x16xf32>
    %c0_8 = arith.constant 0 : index
    %c0_9 = arith.constant 0 : index
    %c0_10 = arith.constant 0 : index
    %6 = vector.load %arg4[%c0_8, %c0_9, %c0_10] : memref<1x16x32xf32, #tpu.memory_space<vmem>>, vector<1x16x32xf32>
    %7 = vector.shape_cast %6 : vector<1x16x32xf32> to vector<16x32xf32>
    %c0_11 = arith.constant 0 : index
    %c0_12 = arith.constant 0 : index
    %8 = vector.load %arg5[%c0_11, %c0_12] : memref<1x32xf32, #tpu.memory_space<vmem>>, vector<1x32xf32>
    %c0_13 = arith.constant 0 : index
    %c0_14 = arith.constant 0 : index
    %9 = vector.load %arg6[%c0_13, %c0_14] : memref<1x32xf32, #tpu.memory_space<vmem>>, vector<1x32xf32>
    %cst = arith.constant dense<0.000000e+00> : vector<16xf32>
    %10 = vector.multi_reduction <add>, %1, %cst [1] : vector<16x32xf32> to vector<16xf32>
    %11 = vector.shape_cast %10 : vector<16xf32> to vector<16x1xf32>
    %cst_15 = arith.constant 3.200000e+01 : f32
    %12 = vector.broadcast %cst_15 : f32 to vector<16x1xf32>
    %13 = arith.divf %11, %12 : vector<16x1xf32>
    %14 = vector.broadcast %13 : vector<16x1xf32> to vector<16x32xf32>
    %15 = arith.subf %1, %14 : vector<16x32xf32>
    %16 = arith.mulf %15, %15 : vector<16x32xf32>
    %cst_16 = arith.constant dense<0.000000e+00> : vector<16xf32>
    %17 = vector.multi_reduction <add>, %16, %cst_16 [1] : vector<16x32xf32> to vector<16xf32>
    %18 = vector.shape_cast %17 : vector<16xf32> to vector<16x1xf32>
    %cst_17 = arith.constant 3.200000e+01 : f32
    %19 = vector.broadcast %cst_17 : f32 to vector<16x1xf32>
    %20 = arith.divf %18, %19 : vector<16x1xf32>
    %21 = vector.broadcast %13 : vector<16x1xf32> to vector<16x32xf32>
    %22 = arith.subf %1, %21 : vector<16x32xf32>
    %cst_18 = arith.constant 9.99999974E-6 : f32
    %23 = vector.broadcast %cst_18 : f32 to vector<16x1xf32>
    %24 = arith.addf %20, %23 : vector<16x1xf32>
    %25 = math.rsqrt %24 : vector<16x1xf32>
    %26 = vector.broadcast %25 : vector<16x1xf32> to vector<16x32xf32>
    %27 = arith.mulf %22, %26 : vector<16x32xf32>
    %28 = vector.broadcast %8 : vector<1x32xf32> to vector<16x32xf32>
    %29 = arith.mulf %27, %28 : vector<16x32xf32>
    %30 = vector.broadcast %9 : vector<1x32xf32> to vector<16x32xf32>
    %31 = arith.addf %29, %30 : vector<16x32xf32>
    %cst_19 = arith.constant dense<0.000000e+00> : vector<32x32xf32>
    %32 = tpu.matmul %3, %31, %cst_19 {dimension_numbers = #tpu.dot_dimension_numbers<[1], [0], [0], [1], [0, 0, 1, 1], [], []>} : vector<32x16xf32>, vector<16x32xf32>, vector<32x32xf32> -> vector<32x32xf32>
    %cst_20 = arith.constant 0.000000e+00 : f32
    %33 = vector.broadcast %cst_20 : f32 to vector<32x32xf32>
    %34 = arith.maximumf %32, %33 : vector<32x32xf32>
    %cst_21 = arith.constant 1.000000e-07 : f32
    %35 = vector.broadcast %cst_21 : f32 to vector<32x32xf32>
    %36 = arith.addf %34, %35 : vector<32x32xf32>
    %c0_22 = arith.constant 0 : index
    %c0_23 = arith.constant 0 : index
    %37 = vector.load %arg7[%c0_22, %c0_23] : memref<1x1xf32, #tpu.memory_space<vmem>>, vector<1x1xf32>
    %38 = vector.broadcast %37 : vector<1x1xf32> to vector<32x32xf32>
    %39 = arith.mulf %36, %38 : vector<32x32xf32>
    %40 = math.exp %39 : vector<32x32xf32>
    %cst_24 = arith.constant dense<0.000000e+00> : vector<16x32xf32>
    %41 = tpu.matmul %7, %40, %cst_24 {dimension_numbers = #tpu.dot_dimension_numbers<[1], [0], [0], [1], [0, 0, 1, 1], [], []>} : vector<16x32xf32>, vector<32x32xf32>, vector<16x32xf32> -> vector<16x32xf32>
    %cst_25 = arith.constant 1.000000e-16 : f32
    %42 = vector.broadcast %cst_25 : f32 to vector<16x32xf32>
    %43 = arith.addf %41, %42 : vector<16x32xf32>
    %cst_26 = arith.constant dense<0.000000e+00> : vector<32x32xf32>
    %44 = tpu.matmul %5, %43, %cst_26 {dimension_numbers = #tpu.dot_dimension_numbers<[1], [0], [0], [1], [0, 0, 1, 1], [], []>} : vector<32x16xf32>, vector<16x32xf32>, vector<32x32xf32> -> vector<32x32xf32>
    %45 = arith.divf %40, %44 : vector<32x32xf32>
    %46 = arith.mulf %45, %36 : vector<32x32xf32>
    %cst_27 = arith.constant dense<0.000000e+00> : vector<16x32xf32>
    %47 = tpu.matmul %7, %46, %cst_27 {dimension_numbers = #tpu.dot_dimension_numbers<[1], [0], [0], [1], [0, 0, 1, 1], [], []>} : vector<16x32xf32>, vector<32x32xf32>, vector<16x32xf32> -> vector<16x32xf32>
    %48 = arith.addf %47, %31 : vector<16x32xf32>
    %c0_28 = arith.constant 0 : index
    %c0_29 = arith.constant 0 : index
    %49 = vector.load %arg8[%c0_28, %c0_29] : memref<32x64xf32, #tpu.memory_space<vmem>>, vector<32x64xf32>
    %cst_30 = arith.constant dense<0.000000e+00> : vector<16x64xf32>
    %50 = tpu.matmul %48, %49, %cst_30 {dimension_numbers = #tpu.dot_dimension_numbers<[1], [0], [0], [1], [0, 0, 1, 1], [], []>} : vector<16x32xf32>, vector<32x64xf32>, vector<16x64xf32> -> vector<16x64xf32>
    %c0_31 = arith.constant 0 : index
    %c0_32 = arith.constant 0 : index
    %51 = vector.load %arg9[%c0_31, %c0_32] : memref<1x64xf32, #tpu.memory_space<vmem>>, vector<1x64xf32>
    %52 = vector.broadcast %51 : vector<1x64xf32> to vector<16x64xf32>
    %53 = arith.addf %50, %52 : vector<16x64xf32>
    %c0_33 = arith.constant 0 : index
    %c0_34 = arith.constant 0 : index
    %54 = vector.load %arg10[%c0_33, %c0_34] : memref<1x64xf32, #tpu.memory_space<vmem>>, vector<1x64xf32>
    %c0_35 = arith.constant 0 : index
    %c0_36 = arith.constant 0 : index
    %55 = vector.load %arg11[%c0_35, %c0_36] : memref<1x64xf32, #tpu.memory_space<vmem>>, vector<1x64xf32>
    %cst_37 = arith.constant dense<0.000000e+00> : vector<16xf32>
    %56 = vector.multi_reduction <add>, %53, %cst_37 [1] : vector<16x64xf32> to vector<16xf32>
    %57 = vector.shape_cast %56 : vector<16xf32> to vector<16x1xf32>
    %cst_38 = arith.constant 6.400000e+01 : f32
    %58 = vector.broadcast %cst_38 : f32 to vector<16x1xf32>
    %59 = arith.divf %57, %58 : vector<16x1xf32>
    %60 = vector.broadcast %59 : vector<16x1xf32> to vector<16x64xf32>
    %61 = arith.subf %53, %60 : vector<16x64xf32>
    %62 = arith.mulf %61, %61 : vector<16x64xf32>
    %cst_39 = arith.constant dense<0.000000e+00> : vector<16xf32>
    %63 = vector.multi_reduction <add>, %62, %cst_39 [1] : vector<16x64xf32> to vector<16xf32>
    %64 = vector.shape_cast %63 : vector<16xf32> to vector<16x1xf32>
    %cst_40 = arith.constant 6.400000e+01 : f32
    %65 = vector.broadcast %cst_40 : f32 to vector<16x1xf32>
    %66 = arith.divf %64, %65 : vector<16x1xf32>
    %67 = vector.broadcast %59 : vector<16x1xf32> to vector<16x64xf32>
    %68 = arith.subf %53, %67 : vector<16x64xf32>
    %cst_41 = arith.constant 9.99999974E-6 : f32
    %69 = vector.broadcast %cst_41 : f32 to vector<16x1xf32>
    %70 = arith.addf %66, %69 : vector<16x1xf32>
    %71 = math.rsqrt %70 : vector<16x1xf32>
    %72 = vector.broadcast %71 : vector<16x1xf32> to vector<16x64xf32>
    %73 = arith.mulf %68, %72 : vector<16x64xf32>
    %74 = vector.broadcast %54 : vector<1x64xf32> to vector<16x64xf32>
    %75 = arith.mulf %73, %74 : vector<16x64xf32>
    %76 = vector.broadcast %55 : vector<1x64xf32> to vector<16x64xf32>
    %77 = arith.addf %75, %76 : vector<16x64xf32>
    %cst_42 = arith.constant 0.000000e+00 : f32
    %78 = vector.broadcast %cst_42 : f32 to vector<16x64xf32>
    %79 = arith.maximumf %77, %78 : vector<16x64xf32>
    %c0_43 = arith.constant 0 : index
    %c0_44 = arith.constant 0 : index
    %80 = vector.load %arg12[%c0_43, %c0_44] : memref<64x32xf32, #tpu.memory_space<vmem>>, vector<64x32xf32>
    %cst_45 = arith.constant dense<0.000000e+00> : vector<16x32xf32>
    %81 = tpu.matmul %79, %80, %cst_45 {dimension_numbers = #tpu.dot_dimension_numbers<[1], [0], [0], [1], [0, 0, 1, 1], [], []>} : vector<16x64xf32>, vector<64x32xf32>, vector<16x32xf32> -> vector<16x32xf32>
    %c0_46 = arith.constant 0 : index
    %c0_47 = arith.constant 0 : index
    %82 = vector.load %arg13[%c0_46, %c0_47] : memref<1x32xf32, #tpu.memory_space<vmem>>, vector<1x32xf32>
    %83 = vector.broadcast %82 : vector<1x32xf32> to vector<16x32xf32>
    %84 = arith.addf %81, %83 : vector<16x32xf32>
    %85 = arith.addf %1, %84 : vector<16x32xf32>
    %c0_48 = arith.constant 0 : index
    %c0_49 = arith.constant 0 : index
    %c0_50 = arith.constant 0 : index
    %86 = vector.load %arg14[%c0_48, %c0_49, %c0_50] : memref<1x16x32xf32, #tpu.memory_space<vmem>>, vector<1x16x32xf32>
    %87 = vector.shape_cast %86 : vector<1x16x32xf32> to vector<16x32xf32>
    %88 = vector.shape_cast %85 : vector<16x32xf32> to vector<1x16x32xf32>
    tpu.vector_store %arg14[%c0_48, %c0_49, %c0_50], %88 {strides = array<i32>} : memref<1x16x32xf32, #tpu.memory_space<vmem>>, vector<1x16x32xf32>,
    return
  }
  func.func @transform_0(%arg0: i32) -> (i32, i32, i32) {
    %c0_i32 = arith.constant 0 : i32
    %c0_i32_0 = arith.constant 0 : i32
    %c0_i32_1 = arith.constant 0 : i32
    return %arg0, %c0_i32, %c0_i32_0 : i32, i32, i32
  }
  func.func @transform_1(%arg0: i32) -> (i32, i32, i32) {
    %c0_i32 = arith.constant 0 : i32
    %c0_i32_0 = arith.constant 0 : i32
    %c0_i32_1 = arith.constant 0 : i32
    return %arg0, %c0_i32, %c0_i32_0 : i32, i32, i32
  }
  func.func @transform_2(%arg0: i32) -> (i32, i32, i32) {
    %c0_i32 = arith.constant 0 : i32
    %c0_i32_0 = arith.constant 0 : i32
    %c0_i32_1 = arith.constant 0 : i32
    return %arg0, %c0_i32, %c0_i32_0 : i32, i32, i32
  }
  func.func @transform_3(%arg0: i32) -> (i32, i32, i32) {
    %c0_i32 = arith.constant 0 : i32
    %c0_i32_0 = arith.constant 0 : i32
    %c0_i32_1 = arith.constant 0 : i32
    return %arg0, %c0_i32, %c0_i32_0 : i32, i32, i32
  }
  func.func @transform_4(%arg0: i32) -> (i32, i32) {
    %c0_i32 = arith.constant 0 : i32
    %c0_i32_0 = arith.constant 0 : i32
    %c0_i32_1 = arith.constant 0 : i32
    return %c0_i32, %c0_i32_0 : i32, i32
  }
  func.func @transform_5(%arg0: i32) -> (i32, i32) {
    %c0_i32 = arith.constant 0 : i32
    %c0_i32_0 = arith.constant 0 : i32
    %c0_i32_1 = arith.constant 0 : i32
    return %c0_i32, %c0_i32_0 : i32, i32
  }
  func.func @transform_6(%arg0: i32) -> (i32, i32) {
    %c0_i32 = arith.constant 0 : i32
    %c0_i32_0 = arith.constant 0 : i32
    %c0_i32_1 = arith.constant 0 : i32
    return %c0_i32, %c0_i32_0 : i32, i32
  }
  func.func @transform_7(%arg0: i32) -> (i32, i32) {
    %c0_i32 = arith.constant 0 : i32
    %c0_i32_0 = arith.constant 0 : i32
    %c0_i32_1 = arith.constant 0 : i32
    return %c0_i32, %c0_i32_0 : i32, i32
  }
  func.func @transform_8(%arg0: i32) -> (i32, i32) {
    %c0_i32 = arith.constant 0 : i32
    %c0_i32_0 = arith.constant 0 : i32
    %c0_i32_1 = arith.constant 0 : i32
    return %c0_i32, %c0_i32_0 : i32, i32
  }
  func.func @transform_9(%arg0: i32) -> (i32, i32) {
    %c0_i32 = arith.constant 0 : i32
    %c0_i32_0 = arith.constant 0 : i32
    %c0_i32_1 = arith.constant 0 : i32
    return %c0_i32, %c0_i32_0 : i32, i32
  }
  func.func @transform_10(%arg0: i32) -> (i32, i32) {
    %c0_i32 = arith.constant 0 : i32
    %c0_i32_0 = arith.constant 0 : i32
    %c0_i32_1 = arith.constant 0 : i32
    return %c0_i32, %c0_i32_0 : i32, i32
  }
  func.func @transform_11(%arg0: i32) -> (i32, i32) {
    %c0_i32 = arith.constant 0 : i32
    %c0_i32_0 = arith.constant 0 : i32
    %c0_i32_1 = arith.constant 0 : i32
    return %c0_i32, %c0_i32_0 : i32, i32
  }
  func.func @transform_12(%arg0: i32) -> (i32, i32) {
    %c0_i32 = arith.constant 0 : i32
    %c0_i32_0 = arith.constant 0 : i32
    %c0_i32_1 = arith.constant 0 : i32
    return %c0_i32, %c0_i32_0 : i32, i32
  }
  func.func @transform_13(%arg0: i32) -> (i32, i32, i32) {
    %c0_i32 = arith.constant 0 : i32
    %c0_i32_0 = arith.constant 0 : i32
    %c0_i32_1 = arith.constant 0 : i32
    return %arg0, %c0_i32, %c0_i32_0 : i32, i32, i32
  }
}

</mosaic_0001>

<llo_original>
// kernel: tpu_custom_call.1
$region0: #{tpu_custom_call.1}
  #allocation0 [shape = 'u32[]', space=smem, size = 0x4, offset = 0x4, fixed_abs, tag = 'smem constant byte address 0x4 - core index']
  #allocation1 [shape = 'u32[144,128]{1,0:T(1,128)}', space=vmem, size = 0x12000, scoped, tag = 'internal scratch']
  #allocation2 [shape = 'f32[1,1]{1,0:T(1,128)S(1)}', space=vmem, size = 0x200, scoped, tag = 'scoped memory for tpu_custom_call.1']
  %s0 = inlined_call_operand.vmem [shape: f32[2,16,32], index: 0, kind: input, shape index: {}]
  %s1 = inlined_call_operand.vmem [shape: f32[2,32,16], index: 1, kind: input, shape index: {}]
  %s2 = inlined_call_operand.vmem [shape: f32[2,32,16], index: 2, kind: input, shape index: {}]
  %s3 = inlined_call_operand.vmem [shape: f32[2,16,32], index: 3, kind: input, shape index: {}]
  %s4 = inlined_call_operand.vmem [shape: f32[1,32], index: 4, kind: input, shape index: {}]
  %s5 = inlined_call_operand.vmem [shape: f32[1,32], index: 5, kind: input, shape index: {}]
  %s6 = inlined_call_operand.<no memory space> [shape: f32[1,1], index: 6, kind: input, shape index: {}]
  %s7 = inlined_call_operand.vmem [shape: f32[32,64], index: 7, kind: input, shape index: {}]
  %s8 = inlined_call_operand.vmem [shape: f32[1,64], index: 8, kind: input, shape index: {}]
  %s9 = inlined_call_operand.vmem [shape: f32[1,64], index: 9, kind: input, shape index: {}]
  %s10 = inlined_call_operand.vmem [shape: f32[1,64], index: 10, kind: input, shape index: {}]
  %s11 = inlined_call_operand.vmem [shape: f32[64,32], index: 11, kind: input, shape index: {}]
  %s12 = inlined_call_operand.vmem [shape: f32[1,32], index: 12, kind: input, shape index: {}]
  %s13 = inlined_call_operand.hbm [shape: f32[2,16,32], index: 13, kind: output, shape index: {}]
  %s14 = sld [smem:[#allocation0]]
  $region85: #{tpu_custom_call.1} parent=0
    _
  %s16 = ssub.s32 1, %s14
  %s17 = scalar_select 0, %s16, %s14
  %v18 = vstv %s6
  %19 = vst [vmem:[#allocation2] sm:$0x1] %v18
  $region1: #{tpu_custom_call.1} parent=0
    #allocation3 [shape = 'u8[16384]{0}', space=vmem, size = 0x4000, scoped, tag = 'output window, operand 0']
    #allocation4 [shape = 's32[2]{0}', space=sflag, size = 0x8, scoped, tag = 'scoped memory for tpu_custom_call.1']
    %20 = vsyncpa [#allocation4], 0
    %s21 = scalar_lea.sflag [#allocation4], 1
    %22 = vsyncpa %s21, 0
    loop: start=0, step=1, limit=4
    $region2: #{tpu_custom_call.1} parent=1 // loop_pre_header
      _
    $region3: #{tpu_custom_call.1} parent=1 // loop_header
      %s24 = sphi 0, %s28
      %p25 = scmp.ge.s32.totalorder %s24, 4
      %s34 = sphi 0, %s36
      %s37 = sphi 0, %s34
      %s38 = sphi 0, %s37
      %s54 = sphi 0, %s38
      %s60 = sphi 0, %s62
      %s63 = sphi 0, %s60
      %s64 = sphi 0, %s63
      %s80 = sphi 0, %s64
      %s86 = sphi 0, %s88
      %s89 = sphi 0, %s86
      %s90 = sphi 0, %s89
      %s106 = sphi 0, %s90
      %s112 = sphi 0, %s114
      %s115 = sphi 0, %s112
      %s116 = sphi 0, %s115
      %s132 = sphi 0, %s116
      %s136 = sphi 0, %s136
      %s138 = sphi 0, %s136
      %s139 = sphi 0, %s138
      %s153 = sphi 0, %s139
      %s157 = sphi 0, %s157
      %s159 = sphi 0, %s157
      %s160 = sphi 0, %s159
      %s174 = sphi 0, %s160
      %s178 = sphi 0, %s178
      %s180 = sphi 0, %s178
      %s181 = sphi 0, %s180
      %s195 = sphi 0, %s181
      %s199 = sphi 0, %s199
      %s201 = sphi 0, %s199
      %s202 = sphi 0, %s201
      %s216 = sphi 0, %s202
      %s220 = sphi 0, %s220
      %s222 = sphi 0, %s220
      %s223 = sphi 0, %s222
      %s237 = sphi 0, %s223
      %s241 = sphi 0, %s241
      %s243 = sphi 0, %s241
      %s244 = sphi 0, %s243
      %s258 = sphi 0, %s244
      %s262 = sphi 0, %s262
      %s264 = sphi 0, %s262
      %s265 = sphi 0, %s264
      %s279 = sphi 0, %s265
      %s283 = sphi 0, %s283
      %s285 = sphi 0, %s283
      %s286 = sphi 0, %s285
      %s300 = sphi 0, %s286
      %s304 = sphi 0, %s304
      %s306 = sphi 0, %s304
      %s307 = sphi 0, %s306
      %s321 = sphi 0, %s307
      %s327 = sphi 0, %s329
      %s330 = sphi 0, %s327
      %s331 = sphi 0, %s330
      %s347 = sphi 0, %s331
    $region4: #{tpu_custom_call.1} parent=1 // loop_header_branch
      %27 = sbr.rel (%p25) target = $region8
    $region5: #{tpu_custom_call.1} parent=1 // loop_body
      %s29 = ssub.s32 %s24, 1
      %s30 = ssub.s32 %s24, 2
      %s31 = sadd.s32 %s24, 1
      %s32 = ssub.s32 %s24, %s31
      %p33 = scmp.eq.s32.totalorder %s32, 0
      %s35 = sadd.s32 %s34, 1
      %s36 = scalar_select %p33, %s34, %s35
      %p39 = pneg %p33
      %p40 = scmp.eq.s32.totalorder %s24, 1
      %p41 = por %p39, %p40
      %p42 = scmp.ne.s32.totalorder %s34, %s37
      %p43 = scmp.eq.s32.totalorder %s24, 0
      %p44 = por %p42, %p43
      %p45 = scmp.ne.s32.totalorder %s34, %s37
      %p46 = scmp.eq.s32.totalorder %s29, 1
      %p47 = por %p45, %p46
      %p48 = scmp.ne.s32.totalorder %s37, %s38
      %p49 = scmp.eq.s32.totalorder %s29, 0
      %p50 = por %p48, %p49
      %p51 = scmp.ne.s32.totalorder %s37, %s38
      %p52 = scmp.eq.s32.totalorder %s30, 1
      %p53 = por %p51, %p52
      %p55 = scmp.ne.s32.totalorder %s38, %s54
      %p56 = scmp.eq.s32.totalorder %s30, 0
      %p57 = por %p55, %p56
      %s58 = ssub.s32 %s24, %s31
      %p59 = scmp.eq.s32.totalorder %s58, 0
      %s61 = sadd.s32 %s60, 1
      %s62 = scalar_select %p59, %s60, %s61
      %p65 = pneg %p59
      %p66 = scmp.eq.s32.totalorder %s24, 1
      %p67 = por %p65, %p66
      %p68 = scmp.ne.s32.totalorder %s60, %s63
      %p69 = scmp.eq.s32.totalorder %s24, 0
      %p70 = por %p68, %p69
      %p71 = scmp.ne.s32.totalorder %s60, %s63
      %p72 = scmp.eq.s32.totalorder %s29, 1
      %p73 = por %p71, %p72
      %p74 = scmp.ne.s32.totalorder %s63, %s64
      %p75 = scmp.eq.s32.totalorder %s29, 0
      %p76 = por %p74, %p75
      %p77 = scmp.ne.s32.totalorder %s63, %s64
      %p78 = scmp.eq.s32.totalorder %s30, 1
      %p79 = por %p77, %p78
      %p81 = scmp.ne.s32.totalorder %s64, %s80
      %p82 = scmp.eq.s32.totalorder %s30, 0
      %p83 = por %p81, %p82
      %s84 = ssub.s32 %s24, %s31
      %p85 = scmp.eq.s32.totalorder %s84, 0
      %s87 = sadd.s32 %s86, 1
      %s88 = scalar_select %p85, %s86, %s87
      %p91 = pneg %p85
      %p92 = scmp.eq.s32.totalorder %s24, 1
      %p93 = por %p91, %p92
      %p94 = scmp.ne.s32.totalorder %s86, %s89
      %p95 = scmp.eq.s32.totalorder %s24, 0
      %p96 = por %p94, %p95
      %p97 = scmp.ne.s32.totalorder %s86, %s89
      %p98 = scmp.eq.s32.totalorder %s29, 1
      %p99 = por %p97, %p98
      %p100 = scmp.ne.s32.totalorder %s89, %s90
      %p101 = scmp.eq.s32.totalorder %s29, 0
      %p102 = por %p100, %p101
      %p103 = scmp.ne.s32.totalorder %s89, %s90
      %p104 = scmp.eq.s32.totalorder %s30, 1
      %p105 = por %p103, %p104
      %p107 = scmp.ne.s32.totalorder %s90, %s106
      %p108 = scmp.eq.s32.totalorder %s30, 0
      %p109 = por %p107, %p108
      %s110 = ssub.s32 %s24, %s31
      %p111 = scmp.eq.s32.totalorder %s110, 0
      %s113 = sadd.s32 %s112, 1
      %s114 = scalar_select %p111, %s112, %s113
      %p117 = pneg %p111
      %p118 = scmp.eq.s32.totalorder %s24, 1
      %p119 = por %p117, %p118
      %p120 = scmp.ne.s32.totalorder %s112, %s115
      %p121 = scmp.eq.s32.totalorder %s24, 0
      %p122 = por %p120, %p121
      %p123 = scmp.ne.s32.totalorder %s112, %s115
      %p124 = scmp.eq.s32.totalorder %s29, 1
      %p125 = por %p123, %p124
      %p126 = scmp.ne.s32.totalorder %s115, %s116
      %p127 = scmp.eq.s32.totalorder %s29, 0
      %p128 = por %p126, %p127
      %p129 = scmp.ne.s32.totalorder %s115, %s116
      %p130 = scmp.eq.s32.totalorder %s30, 1
      %p131 = por %p129, %p130
      %p133 = scmp.ne.s32.totalorder %s116, %s132
      %p134 = scmp.eq.s32.totalorder %s30, 0
      %p135 = por %p133, %p134
      %s137 = sadd.s32 %s136, 1
      %p140 = scmp.eq.s32.totalorder %s24, 1
      %p141 = scmp.ne.s32.totalorder %s136, %s138
      %p142 = scmp.eq.s32.totalorder %s24, 0
      %p143 = por %p141, %p142
      %p144 = scmp.ne.s32.totalorder %s136, %s138
      %p145 = scmp.eq.s32.totalorder %s29, 1
      %p146 = por %p144, %p145
      %p147 = scmp.ne.s32.totalorder %s138, %s139
      %p148 = scmp.eq.s32.totalorder %s29, 0
      %p149 = por %p147, %p148
      %p150 = scmp.ne.s32.totalorder %s138, %s139
      %p151 = scmp.eq.s32.totalorder %s30, 1
      %p152 = por %p150, %p151
      %p154 = scmp.ne.s32.totalorder %s139, %s153
      %p155 = scmp.eq.s32.totalorder %s30, 0
      %p156 = por %p154, %p155
      %s158 = sadd.s32 %s157, 1
      %p161 = scmp.eq.s32.totalorder %s24, 1
      %p162 = scmp.ne.s32.totalorder %s157, %s159
      %p163 = scmp.eq.s32.totalorder %s24, 0
      %p164 = por %p162, %p163
      %p165 = scmp.ne.s32.totalorder %s157, %s159
      %p166 = scmp.eq.s32.totalorder %s29, 1
      %p167 = por %p165, %p166
      %p168 = scmp.ne.s32.totalorder %s159, %s160
      %p169 = scmp.eq.s32.totalorder %s29, 0
      %p170 = por %p168, %p169
      %p171 = scmp.ne.s32.totalorder %s159, %s160
      %p172 = scmp.eq.s32.totalorder %s30, 1
      %p173 = por %p171, %p172
      %p175 = scmp.ne.s32.totalorder %s160, %s174
      %p176 = scmp.eq.s32.totalorder %s30, 0
      %p177 = por %p175, %p176
      %s179 = sadd.s32 %s178, 1
      %p182 = scmp.eq.s32.totalorder %s24, 1
      %p183 = scmp.ne.s32.totalorder %s178, %s180
      %p184 = scmp.eq.s32.totalorder %s24, 0
      %p185 = por %p183, %p184
      %p186 = scmp.ne.s32.totalorder %s178, %s180
      %p187 = scmp.eq.s32.totalorder %s29, 1
      %p188 = por %p186, %p187
      %p189 = scmp.ne.s32.totalorder %s180, %s181
      %p190 = scmp.eq.s32.totalorder %s29, 0
      %p191 = por %p189, %p190
      %p192 = scmp.ne.s32.totalorder %s180, %s181
      %p193 = scmp.eq.s32.totalorder %s30, 1
      %p194 = por %p192, %p193
      %p196 = scmp.ne.s32.totalorder %s181, %s195
      %p197 = scmp.eq.s32.totalorder %s30, 0
      %p198 = por %p196, %p197
      %s200 = sadd.s32 %s199, 1
      %p203 = scmp.eq.s32.totalorder %s24, 1
      %p204 = scmp.ne.s32.totalorder %s199, %s201
      %p205 = scmp.eq.s32.totalorder %s24, 0
      %p206 = por %p204, %p205
      %p207 = scmp.ne.s32.totalorder %s199, %s201
      %p208 = scmp.eq.s32.totalorder %s29, 1
      %p209 = por %p207, %p208
      %p210 = scmp.ne.s32.totalorder %s201, %s202
      %p211 = scmp.eq.s32.totalorder %s29, 0
      %p212 = por %p210, %p211
      %p213 = scmp.ne.s32.totalorder %s201, %s202
      %p214 = scmp.eq.s32.totalorder %s30, 1
      %p215 = por %p213, %p214
      %p217 = scmp.ne.s32.totalorder %s202, %s216
      %p218 = scmp.eq.s32.totalorder %s30, 0
      %p219 = por %p217, %p218
      %s221 = sadd.s32 %s220, 1
      %p224 = scmp.eq.s32.totalorder %s24, 1
      %p225 = scmp.ne.s32.totalorder %s220, %s222
      %p226 = scmp.eq.s32.totalorder %s24, 0
      %p227 = por %p225, %p226
      %p228 = scmp.ne.s32.totalorder %s220, %s222
      %p229 = scmp.eq.s32.totalorder %s29, 1
      %p230 = por %p228, %p229
      %p231 = scmp.ne.s32.totalorder %s222, %s223
      %p232 = scmp.eq.s32.totalorder %s29, 0
      %p233 = por %p231, %p232
      %p234 = scmp.ne.s32.totalorder %s222, %s223
      %p235 = scmp.eq.s32.totalorder %s30, 1
      %p236 = por %p234, %p235
      %p238 = scmp.ne.s32.totalorder %s223, %s237
      %p239 = scmp.eq.s32.totalorder %s30, 0
      %p240 = por %p238, %p239
      %s242 = sadd.s32 %s241, 1
      %p245 = scmp.eq.s32.totalorder %s24, 1
      %p246 = scmp.ne.s32.totalorder %s241, %s243
      %p247 = scmp.eq.s32.totalorder %s24, 0
      %p248 = por %p246, %p247
      %p249 = scmp.ne.s32.totalorder %s241, %s243
      %p250 = scmp.eq.s32.totalorder %s29, 1
      %p251 = por %p249, %p250
      %p252 = scmp.ne.s32.totalorder %s243, %s244
      %p253 = scmp.eq.s32.totalorder %s29, 0
      %p254 = por %p252, %p253
      %p255 = scmp.ne.s32.totalorder %s243, %s244
      %p256 = scmp.eq.s32.totalorder %s30, 1
      %p257 = por %p255, %p256
      %p259 = scmp.ne.s32.totalorder %s244, %s258
      %p260 = scmp.eq.s32.totalorder %s30, 0
      %p261 = por %p259, %p260
      %s263 = sadd.s32 %s262, 1
      %p266 = scmp.eq.s32.totalorder %s24, 1
      %p267 = scmp.ne.s32.totalorder %s262, %s264
      %p268 = scmp.eq.s32.totalorder %s24, 0
      %p269 = por %p267, %p268
      %p270 = scmp.ne.s32.totalorder %s262, %s264
      %p271 = scmp.eq.s32.totalorder %s29, 1
      %p272 = por %p270, %p271
      %p273 = scmp.ne.s32.totalorder %s264, %s265
      %p274 = scmp.eq.s32.totalorder %s29, 0
      %p275 = por %p273, %p274
      %p276 = scmp.ne.s32.totalorder %s264, %s265
      %p277 = scmp.eq.s32.totalorder %s30, 1
      %p278 = por %p276, %p277
      %p280 = scmp.ne.s32.totalorder %s265, %s279
      %p281 = scmp.eq.s32.totalorder %s30, 0
      %p282 = por %p280, %p281
      %s284 = sadd.s32 %s283, 1
      %p287 = scmp.eq.s32.totalorder %s24, 1
      %p288 = scmp.ne.s32.totalorder %s283, %s285
      %p289 = scmp.eq.s32.totalorder %s24, 0
      %p290 = por %p288, %p289
      %p291 = scmp.ne.s32.totalorder %s283, %s285
      %p292 = scmp.eq.s32.totalorder %s29, 1
      %p293 = por %p291, %p292
      %p294 = scmp.ne.s32.totalorder %s285, %s286
      %p295 = scmp.eq.s32.totalorder %s29, 0
      %p296 = por %p294, %p295
      %p297 = scmp.ne.s32.totalorder %s285, %s286
      %p298 = scmp.eq.s32.totalorder %s30, 1
      %p299 = por %p297, %p298
      %p301 = scmp.ne.s32.totalorder %s286, %s300
      %p302 = scmp.eq.s32.totalorder %s30, 0
      %p303 = por %p301, %p302
      %s305 = sadd.s32 %s304, 1
      %p308 = scmp.eq.s32.totalorder %s24, 1
      %p309 = scmp.ne.s32.totalorder %s304, %s306
      %p310 = scmp.eq.s32.totalorder %s24, 0
      %p311 = por %p309, %p310
      %p312 = scmp.ne.s32.totalorder %s304, %s306
      %p313 = scmp.eq.s32.totalorder %s29, 1
      %p314 = por %p312, %p313
      %p315 = scmp.ne.s32.totalorder %s306, %s307
      %p316 = scmp.eq.s32.totalorder %s29, 0
      %p317 = por %p315, %p316
      %p318 = scmp.ne.s32.totalorder %s306, %s307
      %p319 = scmp.eq.s32.totalorder %s30, 1
      %p320 = por %p318, %p319
      %p322 = scmp.ne.s32.totalorder %s307, %s321
      %p323 = scmp.eq.s32.totalorder %s30, 0
      %p324 = por %p322, %p323
      %s325 = ssub.s32 %s24, %s31
      %p326 = scmp.eq.s32.totalorder %s325, 0
      %s328 = sadd.s32 %s327, 1
      %s329 = scalar_select %p326, %s327, %s328
      %p332 = pneg %p326
      %p333 = scmp.eq.s32.totalorder %s24, 1
      %p334 = por %p332, %p333
      %p335 = scmp.ne.s32.totalorder %s327, %s330
      %p336 = scmp.eq.s32.totalorder %s24, 0
      %p337 = por %p335, %p336
      %p338 = scmp.ne.s32.totalorder %s327, %s330
      %p339 = scmp.eq.s32.totalorder %s29, 1
      %p340 = por %p338, %p339
      %p341 = scmp.ne.s32.totalorder %s330, %s331
      %p342 = scmp.eq.s32.totalorder %s29, 0
      %p343 = por %p341, %p342
      %p344 = scmp.ne.s32.totalorder %s330, %s331
      %p345 = scmp.eq.s32.totalorder %s30, 1
      %p346 = por %p344, %p345
      %p348 = scmp.ne.s32.totalorder %s331, %s347
      %p349 = scmp.eq.s32.totalorder %s30, 0
      %p350 = por %p348, %p349
      %p351 = scmp.le.s32.totalorder 1, %s24
      %p352 = scmp.lt.s32.totalorder %s24, 3
      %p353 = pnand %p351, %p352
      %p354 = pneg %p353
      // Predicated region
      $region9: #{tpu_custom_call.1} parent=5 // pred_check
        _
      $region10: #{tpu_custom_call.1} parent=5 // pred_check_branch
        %356 = sbr.rel (%p353) target = $region12
      $region11: #{tpu_custom_call.1} parent=5 // pred_region
        %s357 = ssub.s32 %s24, 1
        // Predicated region
        $region13: #{tpu_custom_call.1} parent=11 // pred_check
          %p358 = pneg %p149
        $region14: #{tpu_custom_call.1} parent=11 // pred_check_branch
          %360 = sbr.rel (%p358) target = $region16
        $region15: #{tpu_custom_call.1} parent=11 // pred_region
          _
        $region16: #{tpu_custom_call.1} parent=11 // pred_fallthru
          _
        // Predicated region
        $region17: #{tpu_custom_call.1} parent=11 // pred_check
          %p361 = pneg %p170
        $region18: #{tpu_custom_call.1} parent=11 // pred_check_branch
          %363 = sbr.rel (%p361) target = $region20
        $region19: #{tpu_custom_call.1} parent=11 // pred_region
          _
        $region20: #{tpu_custom_call.1} parent=11 // pred_fallthru
          _
        // Predicated region
        $region21: #{tpu_custom_call.1} parent=11 // pred_check
          %p364 = pneg %p191
        $region22: #{tpu_custom_call.1} parent=11 // pred_check_branch
          %366 = sbr.rel (%p364) target = $region24
        $region23: #{tpu_custom_call.1} parent=11 // pred_region
          _
        $region24: #{tpu_custom_call.1} parent=11 // pred_fallthru
          _
        // Predicated region
        $region25: #{tpu_custom_call.1} parent=11 // pred_check
          %p367 = pneg %p212
        $region26: #{tpu_custom_call.1} parent=11 // pred_check_branch
          %369 = sbr.rel (%p367) target = $region28
        $region27: #{tpu_custom_call.1} parent=11 // pred_region
          _
        $region28: #{tpu_custom_call.1} parent=11 // pred_fallthru
          _
        // Predicated region
        $region29: #{tpu_custom_call.1} parent=11 // pred_check
          %p370 = pneg %p233
        $region30: #{tpu_custom_call.1} parent=11 // pred_check_branch
          %372 = sbr.rel (%p370) target = $region32
        $region31: #{tpu_custom_call.1} parent=11 // pred_region
          _
        $region32: #{tpu_custom_call.1} parent=11 // pred_fallthru
          _
        // Predicated region
        $region33: #{tpu_custom_call.1} parent=11 // pred_check
          %p373 = pneg %p254
        $region34: #{tpu_custom_call.1} parent=11 // pred_check_branch
          %375 = sbr.rel (%p373) target = $region36
        $region35: #{tpu_custom_call.1} parent=11 // pred_region
          _
        $region36: #{tpu_custom_call.1} parent=11 // pred_fallthru
          _
        // Predicated region
        $region37: #{tpu_custom_call.1} parent=11 // pred_check
          %p376 = pneg %p275
        $region38: #{tpu_custom_call.1} parent=11 // pred_check_branch
          %378 = sbr.rel (%p376) target = $region40
        $region39: #{tpu_custom_call.1} parent=11 // pred_region
          _
        $region40: #{tpu_custom_call.1} parent=11 // pred_fallthru
          _
        // Predicated region
        $region41: #{tpu_custom_call.1} parent=11 // pred_check
          %p379 = pneg %p296
        $region42: #{tpu_custom_call.1} parent=11 // pred_check_branch
          %381 = sbr.rel (%p379) target = $region44
        $region43: #{tpu_custom_call.1} parent=11 // pred_region
          _
        $region44: #{tpu_custom_call.1} parent=11 // pred_fallthru
          _
        // Predicated region
        $region45: #{tpu_custom_call.1} parent=11 // pred_check
          %p382 = pneg %p317
        $region46: #{tpu_custom_call.1} parent=11 // pred_check_branch
          %384 = sbr.rel (%p382) target = $region48
        $region47: #{tpu_custom_call.1} parent=11 // pred_region
          _
        $region48: #{tpu_custom_call.1} parent=11 // pred_fallthru
          _
      $region12: #{tpu_custom_call.1} parent=5 // pred_fallthru
        _
      %p385 = scmp.lt.s32.totalorder %s24, 2
      // Predicated region
      $region49: #{tpu_custom_call.1} parent=5 // pred_check
        %p386 = pneg %p385
      $region50: #{tpu_custom_call.1} parent=5 // pred_check_branch
        %388 = sbr.rel (%p386) target = $region52
      $region51: #{tpu_custom_call.1} parent=5 // pred_region
        // Predicated region
        $region53: #{tpu_custom_call.1} parent=51 // pred_check
          %p389 = pneg %p44
        $region54: #{tpu_custom_call.1} parent=51 // pred_check_branch
          %391 = sbr.rel (%p389) target = $region56
        $region55: #{tpu_custom_call.1} parent=51 // pred_region
          %p392 = scmp.lt.s32.totalorder %s24, 1
          %s393 = scalar_select %p392, %s24, 1
          %s394 = smul.addr %s393, 2
          %s395 = smul.addr %s394, 8
          %s396 = scalar_lea.vmem %s0, %s395
        $region56: #{tpu_custom_call.1} parent=51 // pred_fallthru
          _
        // Predicated region
        $region57: #{tpu_custom_call.1} parent=51 // pred_check
          %p397 = pneg %p70
        $region58: #{tpu_custom_call.1} parent=51 // pred_check_branch
          %399 = sbr.rel (%p397) target = $region60
        $region59: #{tpu_custom_call.1} parent=51 // pred_region
          %p400 = scmp.lt.s32.totalorder %s24, 1
          %s401 = scalar_select %p400, %s24, 1
          %s402 = smul.addr %s401, 4
          %s403 = smul.addr %s402, 8
          %s404 = scalar_lea.vmem %s1, %s403
        $region60: #{tpu_custom_call.1} parent=51 // pred_fallthru
          _
        // Predicated region
        $region61: #{tpu_custom_call.1} parent=51 // pred_check
          %p405 = pneg %p96
        $region62: #{tpu_custom_call.1} parent=51 // pred_check_branch
          %407 = sbr.rel (%p405) target = $region64
        $region63: #{tpu_custom_call.1} parent=51 // pred_region
          %p408 = scmp.lt.s32.totalorder %s24, 1
          %s409 = scalar_select %p408, %s24, 1
          %s410 = smul.addr %s409, 4
          %s411 = smul.addr %s410, 8
          %s412 = scalar_lea.vmem %s2, %s411
        $region64: #{tpu_custom_call.1} parent=51 // pred_fallthru
          _
        // Predicated region
        $region65: #{tpu_custom_call.1} parent=51 // pred_check
          %p413 = pneg %p122
        $region66: #{tpu_custom_call.1} parent=51 // pred_check_branch
          %415 = sbr.rel (%p413) target = $region68
        $region67: #{tpu_custom_call.1} parent=51 // pred_region
          %p416 = scmp.lt.s32.totalorder %s24, 1
          %s417 = scalar_select %p416, %s24, 1
          %s418 = smul.addr %s417, 2
          %s419 = smul.addr %s418, 8
          %s420 = scalar_lea.vmem %s3, %s419
        $region68: #{tpu_custom_call.1} parent=51 // pred_fallthru
          _
      $region52: #{tpu_custom_call.1} parent=5 // pred_fallthru
        _
      %p421 = scmp.le.s32.totalorder 1, %s24
      %p422 = scmp.lt.s32.totalorder %s24, 3
      %p423 = pnand %p421, %p422
      %p424 = pneg %p423
      // Predicated region
      $region69: #{tpu_custom_call.1} parent=5 // pred_check
        _
      $region70: #{tpu_custom_call.1} parent=5 // pred_check_branch
        %426 = sbr.rel (%p423) target = $region72
      $region71: #{tpu_custom_call.1} parent=5 // pred_region
        %s427 = ssub.s32 %s24, 1
        %p428 = scmp.lt.s32.totalorder %s29, 1
        %s429 = scalar_select %p428, %s29, 1
        %s430 = smul.addr %s429, 2
        %s431 = smul.addr %s430, 8
        %s432 = scalar_lea.vmem %s0, %s431
        %p433 = pneg %p50
        %p434 = pneg %p47
        %p435 = scmp.lt.s32.totalorder %s29, 1
        %s436 = scalar_select %p435, %s29, 1
        %s437 = smul.addr %s436, 4
        %s438 = smul.addr %s437, 8
        %s439 = scalar_lea.vmem %s1, %s438
        %p440 = pneg %p76
        %p441 = pneg %p73
        %p442 = scmp.lt.s32.totalorder %s29, 1
        %s443 = scalar_select %p442, %s29, 1
        %s444 = smul.addr %s443, 4
        %s445 = smul.addr %s444, 8
        %s446 = scalar_lea.vmem %s2, %s445
        %p447 = pneg %p102
        %p448 = pneg %p99
        %p449 = scmp.lt.s32.totalorder %s29, 1
        %s450 = scalar_select %p449, %s29, 1
        %s451 = smul.addr %s450, 2
        %s452 = smul.addr %s451, 8
        %s453 = scalar_lea.vmem %s3, %s452
        %p454 = pneg %p128
        %p455 = pneg %p125
        %p456 = pneg %p149
        %p457 = pneg %p146
        %p458 = pneg %p170
        %p459 = pneg %p167
        %p460 = pneg %p191
        %p461 = pneg %p188
        %p462 = pneg %p212
        %p463 = pneg %p209
        %p464 = pneg %p233
        %p465 = pneg %p230
        %p466 = pneg %p254
        %p467 = pneg %p251
        %p468 = pneg %p275
        %p469 = pneg %p272
        %p470 = pneg %p296
        %p471 = pneg %p293
        %p472 = pneg %p317
        %p473 = pneg %p314
        %p474 = pneg %p343
        %p475 = pneg %p340
        %s476 = sand.u32 %s330, 1
        %s477 = scalar_lea.sflag [#allocation4], %s476
        %s478 = sand.u32 %s330, 1
        %s479 = smul.addr %s478, 16
        %s480 = scalar_lea.vmem [#allocation3], %s479
        %p481 = scmp.lt.s32.totalorder %s29, 1
        %s482 = scalar_select %p481, %s29, 1
        %s483 = smul.addr %s482, 2
        %s484 = smul.addr %s483, 8
        %s485 = scalar_lea.vmem %s0, %s484
        %p486 = scmp.lt.s32.totalorder %s29, 1
        %s487 = scalar_select %p486, %s29, 1
        %s488 = smul.addr %s487, 4
        %s489 = smul.addr %s488, 8
        %s490 = scalar_lea.vmem %s1, %s489
        %p491 = scmp.lt.s32.totalorder %s29, 1
        %s492 = scalar_select %p491, %s29, 1
        %s493 = smul.addr %s492, 4
        %s494 = smul.addr %s493, 8
        %s495 = scalar_lea.vmem %s2, %s494
        %p496 = scmp.lt.s32.totalorder %s29, 1
        %s497 = scalar_select %p496, %s29, 1
        %s498 = smul.addr %s497, 2
        %s499 = smul.addr %s498, 8
        %s500 = scalar_lea.vmem %s3, %s499
        %v501 = vld [vmem:[%s485] sm:$0xff]
        %v502 = vld [vmem:[%s485 + $0x8] sm:$0xff]
        %v503 = vld [vmem:[%s490] sm:$0xff]
        %v504 = vld [vmem:[%s490 + $0x8] sm:$0xff]
        %v505 = vld [vmem:[%s490 + $0x10] sm:$0xff]
        %v506 = vld [vmem:[%s490 + $0x18] sm:$0xff]
        %v507 = vld [vmem:[%s495] sm:$0xff]
        %v508 = vld [vmem:[%s495 + $0x8] sm:$0xff]
        %v509 = vld [vmem:[%s495 + $0x10] sm:$0xff]
        %v510 = vld [vmem:[%s495 + $0x18] sm:$0xff]
        %v511 = vld [vmem:[%s500] sm:$0xff]
        %v512 = vld [vmem:[%s500 + $0x8] sm:$0xff]
        %v513 = vld [vmem:[%s4] sm:$0x1]
        %v514 = vld [vmem:[%s5] sm:$0x1]
        %vm515 = vcmask 261120
        %v516 = vsel %vm515, %v501, 0.0
        %517 = vadd.xlane.f32.xlu0 %v516
        %v518 = vpop.xlane.xlu0 %517
        %v519 = vsel %vm515, %v502, 0.0
        %520 = vadd.xlane.f32.xlu0 %v519
        %v521 = vpop.xlane.xlu0 %520
        %v522 = vrcp.pop 32.0
        %v523 = vmul.f32 %v518, %v522
        %v524 = vmul.f32 %v521, %v522
        %v525 = vsub.f32 %v501, %v523
        %v526 = vsub.f32 %v502, %v524
        %v527 = vmul.f32 %v525, %v525
        %v528 = vmul.f32 %v526, %v526
        %v529 = vsel %vm515, %v527, 0.0
        %530 = vadd.xlane.f32.xlu0 %v529
        %v531 = vpop.xlane.xlu0 %530
        %v532 = vsel %vm515, %v528, 0.0
        %533 = vadd.xlane.f32.xlu0 %v532
        %v534 = vpop.xlane.xlu0 %533
        %v535 = vmul.f32 %v531, %v522
        %v536 = vmul.f32 %v534, %v522
        %v537 = vadd.f32 %v535, 1e-05
        %v538 = vadd.f32 %v536, 1e-05
        %v539 = vrsqrt.pop %v537
        %v540 = vrsqrt.pop %v538
        %v541 = vmul.f32 %v525, %v539
        %v542 = vmul.f32 %v526, %v540
        %v544 = vlaneseq
        %v545 = vshrl.u32 %v544, 7
        %v546 = vsub.s32 0, %v545
        %v547 = vrot.slane %v513, %v546
        %v549 = vmul.f32 %v541, %v547
        %v550 = vmul.f32 %v542, %v547
        %v552 = vlaneseq
        %v553 = vshrl.u32 %v552, 7
        %v554 = vsub.s32 0, %v553
        %v555 = vrot.slane %v514, %v554
        %v557 = vadd.f32 %v549, %v555
        %v558 = vadd.f32 %v550, %v555
        %vm559 = vcmask 130048
        %v561 = vsel %vm559, %v503, 0
        %v564 = vsel %vm559, %v504, 0
        %v567 = vsel %vm559, %v505, 0
        %v570 = vsel %vm559, %v506, 0
        %572 = vmatprep.subr.mxu0 0.0
        %573 = vmatpush1.msra.mxu0 0.0
        %574 = vmatprep.subr.mxu0 0.0
        %575 = vmatpush1.msra.mxu0 0.0
        %576 = vmatprep.subr.mxu0 0.0
        %577 = vmatpush1.msra.mxu0 0.0
        %578 = vmatprep.subr.mxu0 0.0
        %579 = vmatpush1.msra.mxu0 0.0
        %580 = vmatprep.subr.mxu0 0.0
        %581 = vmatpush1.msra.mxu0 0.0
        %582 = vmatprep.subr.mxu0 0.0
        %583 = vmatpush1.msra.mxu0 0.0
        %584 = vmatprep.subr.mxu0 0.0
        %585 = vmatpush1.msra.mxu0 0.0
        %586 = vmatprep.subr.mxu0 0.0
        %587 = vmatpush1.msra.mxu0 0.0
        %588 = vmatprep.subr.mxu0 0.0
        %589 = vmatpush1.msra.mxu0 0.0
        %590 = vmatprep.subr.mxu0 0.0
        %591 = vmatpush1.msra.mxu0 0.0
        %592 = vmatprep.subr.mxu0 0.0
        %593 = vmatpush1.msra.mxu0 0.0
        %594 = vmatprep.subr.mxu0 0.0
        %595 = vmatpush1.msra.mxu0 0.0
        %596 = vmatprep.subr.mxu0 0.0
        %597 = vmatpush1.msra.mxu0 0.0
        %598 = vmatprep.subr.mxu0 0.0
        %599 = vmatpush1.msra.mxu0 0.0
        %600 = vmatprep.subr.mxu0 0.0
        %601 = vmatpush1.msra.mxu0 %v558
        %602 = vmatprep.subr.mxu0 0.0
        %603 = vmatpush1.msra.mxu0 %v557
        %604 = vmatprep.subr.mxu0 0.0
        %605 = vmatpush2.msra.mxu0 0.0
        %606 = vmatprep.subr.mxu0 0.0
        %607 = vmatpush2.msra.mxu0 0.0
        %608 = vmatprep.subr.mxu0 0.0
        %609 = vmatpush2.msra.mxu0 0.0
        %610 = vmatprep.subr.mxu0 0.0
        %611 = vmatpush2.msra.mxu0 0.0
        %612 = vmatprep.subr.mxu0 0.0
        %613 = vmatpush2.msra.mxu0 0.0
        %614 = vmatprep.subr.mxu0 0.0
        %615 = vmatpush2.msra.mxu0 0.0
        %616 = vmatprep.subr.mxu0 0.0
        %617 = vmatpush2.msra.mxu0 0.0
        %618 = vmatprep.subr.mxu0 0.0
        %619 = vmatpush2.msra.mxu0 0.0
        %620 = vmatprep.subr.mxu0 0.0
        %621 = vmatpush2.msra.mxu0 0.0
        %622 = vmatprep.subr.mxu0 0.0
        %623 = vmatpush2.msra.mxu0 0.0
        %624 = vmatprep.subr.mxu0 0.0
        %625 = vmatpush2.msra.mxu0 0.0
        %626 = vmatprep.subr.mxu0 0.0
        %627 = vmatpush2.msra.mxu0 0.0
        %628 = vmatprep.subr.mxu0 0.0
        %629 = vmatpush2.msra.mxu0 0.0
        %630 = vmatprep.subr.mxu0 0.0
        %631 = vmatpush2.msra.mxu0 0.0
        %632 = vmatprep.subr.mxu0 0.0
        %633 = vmatpush2.msra.mxu0 0.0
        %634 = vmatprep.subr.mxu0 0.0
        %635 = vmatpush2.msra.mxu0 0.0
        %636 = vmatprep.mubr.f32.mxu0 0.0
        %637 = vmatmul.mubr.f32.gmra.mxu0 %v561
        %v638 = vpop.f32.mrf.mxu0
        %v639 = vadd.f32 0.0, %v638
        %v640 = vpop.f32.mrf.mxu0
        %641 = vmatprep.mubr.f32.mxu0 0.0
        %642 = vmatmul.mubr.f32.gmra.mxu0 %v564
        %v643 = vpop.f32.mrf.mxu0
        %v644 = vadd.f32 0.0, %v643
        %v645 = vpop.f32.mrf.mxu0
        %646 = vmatprep.mubr.f32.mxu0 0.0
        %647 = vmatmul.mubr.f32.gmra.mxu0 %v567
        %v648 = vpop.f32.mrf.mxu0
        %v649 = vadd.f32 0.0, %v648
        %v650 = vpop.f32.mrf.mxu0
        %651 = vmatprep.mubr.f32.mxu0 0.0
        %652 = vmatmul.mubr.f32.gmra.mxu0 %v570
        %v653 = vpop.f32.mrf.mxu0
        %v654 = vadd.f32 0.0, %v653
        %v655 = vpop.f32.mrf.mxu0
        %656 = vdwg.mxu0
        %v657 = vmax.f32 %v639, 0.0
        %v658 = vmax.f32 %v644, 0.0
        %v659 = vmax.f32 %v649, 0.0
        %v660 = vmax.f32 %v654, 0.0
        %v661 = vadd.f32 %v657, 1e-07
        %v662 = vadd.f32 %v658, 1e-07
        %v663 = vadd.f32 %v659, 1e-07
        %v664 = vadd.f32 %v660, 1e-07
        %v665 = vld [vmem:[#allocation2] sm:$0x1]
        %v667 = vlaneseq
        %v668 = vshrl.u32 %v667, 7
        %v669 = vsub.s32 0, %v668
        %v670 = vrot.slane %v665, %v669
        %671 = vset.pattern.permute.xlu0 0
        %672 = vperm.xlu0 %671, %v670
        %v673 = vpop.permute.xlu0 %672
        %v675 = vmul.f32 %v661, %v673
        %v676 = vmul.f32 %v662, %v673
        %v677 = vmul.f32 %v663, %v673
        %v678 = vmul.f32 %v664, %v673
        %v679 = vmul.f32 %v675, 1.442695
        %v680 = vpow.pop %v679
        %v681 = vmul.f32 %v676, 1.442695
        %v682 = vpow.pop %v681
        %v683 = vmul.f32 %v677, 1.442695
        %v684 = vpow.pop %v683
        %v685 = vmul.f32 %v678, 1.442695
        %v686 = vpow.pop %v685
        %v688 = vsel %vm515, %v511, 0
        %v691 = vsel %vm515, %v512, 0
        %693 = vmatprep.subr.mxu0 0.0
        %694 = vmatpush1.msra.mxu0 0.0
        %695 = vmatprep.subr.mxu0 0.0
        %696 = vmatpush1.msra.mxu0 0.0
        %697 = vmatprep.subr.mxu0 0.0
        %698 = vmatpush1.msra.mxu0 0.0
        %699 = vmatprep.subr.mxu0 0.0
        %700 = vmatpush1.msra.mxu0 0.0
        %701 = vmatprep.subr.mxu0 0.0
        %702 = vmatpush1.msra.mxu0 0.0
        %703 = vmatprep.subr.mxu0 0.0
        %704 = vmatpush1.msra.mxu0 0.0
        %705 = vmatprep.subr.mxu0 0.0
        %706 = vmatpush1.msra.mxu0 0.0
        %707 = vmatprep.subr.mxu0 0.0
        %708 = vmatpush1.msra.mxu0 0.0
        %709 = vmatprep.subr.mxu0 0.0
        %710 = vmatpush1.msra.mxu0 0.0
        %711 = vmatprep.subr.mxu0 0.0
        %712 = vmatpush1.msra.mxu0 0.0
        %713 = vmatprep.subr.mxu0 0.0
        %714 = vmatpush1.msra.mxu0 0.0
        %715 = vmatprep.subr.mxu0 0.0
        %716 = vmatpush1.msra.mxu0 0.0
        %717 = vmatprep.subr.mxu0 0.0
        %718 = vmatpush1.msra.mxu0 %v686
        %719 = vmatprep.subr.mxu0 0.0
        %720 = vmatpush1.msra.mxu0 %v684
        %721 = vmatprep.subr.mxu0 0.0
        %722 = vmatpush1.msra.mxu0 %v682
        %723 = vmatprep.subr.mxu0 0.0
        %724 = vmatpush1.msra.mxu0 %v680
        %725 = vmatprep.subr.mxu0 0.0
        %726 = vmatpush2.msra.mxu0 0.0
        %727 = vmatprep.subr.mxu0 0.0
        %728 = vmatpush2.msra.mxu0 0.0
        %729 = vmatprep.subr.mxu0 0.0
        %730 = vmatpush2.msra.mxu0 0.0
        %731 = vmatprep.subr.mxu0 0.0
        %732 = vmatpush2.msra.mxu0 0.0
        %733 = vmatprep.subr.mxu0 0.0
        %734 = vmatpush2.msra.mxu0 0.0
        %735 = vmatprep.subr.mxu0 0.0
        %736 = vmatpush2.msra.mxu0 0.0
        %737 = vmatprep.subr.mxu0 0.0
        %738 = vmatpush2.msra.mxu0 0.0
        %739 = vmatprep.subr.mxu0 0.0
        %740 = vmatpush2.msra.mxu0 0.0
        %741 = vmatprep.subr.mxu0 0.0
        %742 = vmatpush2.msra.mxu0 0.0
        %743 = vmatprep.subr.mxu0 0.0
        %744 = vmatpush2.msra.mxu0 0.0
        %745 = vmatprep.subr.mxu0 0.0
        %746 = vmatpush2.msra.mxu0 0.0
        %747 = vmatprep.subr.mxu0 0.0
        %748 = vmatpush2.msra.mxu0 0.0
        %749 = vmatprep.subr.mxu0 0.0
        %750 = vmatpush2.msra.mxu0 0.0
        %751 = vmatprep.subr.mxu0 0.0
        %752 = vmatpush2.msra.mxu0 0.0
        %753 = vmatprep.subr.mxu0 0.0
        %754 = vmatpush2.msra.mxu0 0.0
        %755 = vmatprep.subr.mxu0 0.0
        %756 = vmatpush2.msra.mxu0 0.0
        %757 = vmatprep.mubr.f32.mxu0 0.0
        %758 = vmatmul.mubr.f32.gmra.mxu0 %v688
        %v759 = vpop.f32.mrf.mxu0
        %v760 = vadd.f32 1e-16, %v759
        %v761 = vpop.f32.mrf.mxu0
        %762 = vmatprep.mubr.f32.mxu0 0.0
        %763 = vmatmul.mubr.f32.gmra.mxu0 %v691
        %v764 = vpop.f32.mrf.mxu0
        %v765 = vadd.f32 1e-16, %v764
        %v766 = vpop.f32.mrf.mxu0
        %767 = vdwg.mxu0
        %v769 = vsel %vm559, %v507, 0
        %v772 = vsel %vm559, %v508, 0
        %v775 = vsel %vm559, %v509, 0
        %v778 = vsel %vm559, %v510, 0
        %780 = vmatprep.subr.mxu0 0.0
        %781 = vmatpush1.msra.mxu0 0.0
        %782 = vmatprep.subr.mxu0 0.0
        %783 = vmatpush1.msra.mxu0 0.0
        %784 = vmatprep.subr.mxu0 0.0
        %785 = vmatpush1.msra.mxu0 0.0
        %786 = vmatprep.subr.mxu0 0.0
        %787 = vmatpush1.msra.mxu0 0.0
        %788 = vmatprep.subr.mxu0 0.0
        %789 = vmatpush1.msra.mxu0 0.0
        %790 = vmatprep.subr.mxu0 0.0
        %791 = vmatpush1.msra.mxu0 0.0
        %792 = vmatprep.subr.mxu0 0.0
        %793 = vmatpush1.msra.mxu0 0.0
        %794 = vmatprep.subr.mxu0 0.0
        %795 = vmatpush1.msra.mxu0 0.0
        %796 = vmatprep.subr.mxu0 0.0
        %797 = vmatpush1.msra.mxu0 0.0
        %798 = vmatprep.subr.mxu0 0.0
        %799 = vmatpush1.msra.mxu0 0.0
        %800 = vmatprep.subr.mxu0 0.0
        %801 = vmatpush1.msra.mxu0 0.0
        %802 = vmatprep.subr.mxu0 0.0
        %803 = vmatpush1.msra.mxu0 0.0
        %804 = vmatprep.subr.mxu0 0.0
        %805 = vmatpush1.msra.mxu0 0.0
        %806 = vmatprep.subr.mxu0 0.0
        %807 = vmatpush1.msra.mxu0 0.0
        %808 = vmatprep.subr.mxu0 0.0
        %809 = vmatpush1.msra.mxu0 %v765
        %810 = vmatprep.subr.mxu0 0.0
        %811 = vmatpush1.msra.mxu0 %v760
        %812 = vmatprep.subr.mxu0 0.0
        %813 = vmatpush2.msra.mxu0 0.0
        %814 = vmatprep.subr.mxu0 0.0
        %815 = vmatpush2.msra.mxu0 0.0
        %816 = vmatprep.subr.mxu0 0.0
        %817 = vmatpush2.msra.mxu0 0.0
        %818 = vmatprep.subr.mxu0 0.0
        %819 = vmatpush2.msra.mxu0 0.0
        %820 = vmatprep.subr.mxu0 0.0
        %821 = vmatpush2.msra.mxu0 0.0
        %822 = vmatprep.subr.mxu0 0.0
        %823 = vmatpush2.msra.mxu0 0.0
        %824 = vmatprep.subr.mxu0 0.0
        %825 = vmatpush2.msra.mxu0 0.0
        %826 = vmatprep.subr.mxu0 0.0
        %827 = vmatpush2.msra.mxu0 0.0
        %828 = vmatprep.subr.mxu0 0.0
        %829 = vmatpush2.msra.mxu0 0.0
        %830 = vmatprep.subr.mxu0 0.0
        %831 = vmatpush2.msra.mxu0 0.0
        %832 = vmatprep.subr.mxu0 0.0
        %833 = vmatpush2.msra.mxu0 0.0
        %834 = vmatprep.subr.mxu0 0.0
        %835 = vmatpush2.msra.mxu0 0.0
        %836 = vmatprep.subr.mxu0 0.0
        %837 = vmatpush2.msra.mxu0 0.0
        %838 = vmatprep.subr.mxu0 0.0
        %839 = vmatpush2.msra.mxu0 0.0
        %840 = vmatprep.subr.mxu0 0.0
        %841 = vmatpush2.msra.mxu0 0.0
        %842 = vmatprep.subr.mxu0 0.0
        %843 = vmatpush2.msra.mxu0 0.0
        %844 = vmatprep.mubr.f32.mxu0 0.0
        %845 = vmatmul.mubr.f32.gmra.mxu0 %v769
        %v846 = vpop.f32.mrf.mxu0
        %v847 = vadd.f32 0.0, %v846
        %v848 = vpop.f32.mrf.mxu0
        %849 = vmatprep.mubr.f32.mxu0 0.0
        %850 = vmatmul.mubr.f32.gmra.mxu0 %v772
        %v851 = vpop.f32.mrf.mxu0
        %v852 = vadd.f32 0.0, %v851
        %v853 = vpop.f32.mrf.mxu0
        %854 = vmatprep.mubr.f32.mxu0 0.0
        %855 = vmatmul.mubr.f32.gmra.mxu0 %v775
        %v856 = vpop.f32.mrf.mxu0
        %v857 = vadd.f32 0.0, %v856
        %v858 = vpop.f32.mrf.mxu0
        %859 = vmatprep.mubr.f32.mxu0 0.0
        %860 = vmatmul.mubr.f32.gmra.mxu0 %v778
        %v861 = vpop.f32.mrf.mxu0
        %v862 = vadd.f32 0.0, %v861
        %v863 = vpop.f32.mrf.mxu0
        %864 = vdwg.mxu0
        %v865 = vrcp.pop %v847
        %v866 = vmul.f32 %v680, %v865
        %v867 = vrcp.pop %v852
        %v868 = vmul.f32 %v682, %v867
        %v869 = vrcp.pop %v857
        %v870 = vmul.f32 %v684, %v869
        %v871 = vrcp.pop %v862
        %v872 = vmul.f32 %v686, %v871
        %v873 = vmul.f32 %v866, %v661
        %v874 = vmul.f32 %v868, %v662
        %v875 = vmul.f32 %v870, %v663
        %v876 = vmul.f32 %v872, %v664
        %877 = vmatprep.subr.mxu0 0.0
        %878 = vmatpush1.msra.mxu0 0.0
        %879 = vmatprep.subr.mxu0 0.0
        %880 = vmatpush1.msra.mxu0 0.0
        %881 = vmatprep.subr.mxu0 0.0
        %882 = vmatpush1.msra.mxu0 0.0
        %883 = vmatprep.subr.mxu0 0.0
        %884 = vmatpush1.msra.mxu0 0.0
        %885 = vmatprep.subr.mxu0 0.0
        %886 = vmatpush1.msra.mxu0 0.0
        %887 = vmatprep.subr.mxu0 0.0
        %888 = vmatpush1.msra.mxu0 0.0
        %889 = vmatprep.subr.mxu0 0.0
        %890 = vmatpush1.msra.mxu0 0.0
        %891 = vmatprep.subr.mxu0 0.0
        %892 = vmatpush1.msra.mxu0 0.0
        %893 = vmatprep.subr.mxu0 0.0
        %894 = vmatpush1.msra.mxu0 0.0
        %895 = vmatprep.subr.mxu0 0.0
        %896 = vmatpush1.msra.mxu0 0.0
        %897 = vmatprep.subr.mxu0 0.0
        %898 = vmatpush1.msra.mxu0 0.0
        %899 = vmatprep.subr.mxu0 0.0
        %900 = vmatpush1.msra.mxu0 0.0
        %901 = vmatprep.subr.mxu0 0.0
        %902 = vmatpush1.msra.mxu0 %v876
        %903 = vmatprep.subr.mxu0 0.0
        %904 = vmatpush1.msra.mxu0 %v875
        %905 = vmatprep.subr.mxu0 0.0
        %906 = vmatpush1.msra.mxu0 %v874
        %907 = vmatprep.subr.mxu0 0.0
        %908 = vmatpush1.msra.mxu0 %v873
        %909 = vmatprep.subr.mxu0 0.0
        %910 = vmatpush2.msra.mxu0 0.0
        %911 = vmatprep.subr.mxu0 0.0
        %912 = vmatpush2.msra.mxu0 0.0
        %913 = vmatprep.subr.mxu0 0.0
        %914 = vmatpush2.msra.mxu0 0.0
        %915 = vmatprep.subr.mxu0 0.0
        %916 = vmatpush2.msra.mxu0 0.0
        %917 = vmatprep.subr.mxu0 0.0
        %918 = vmatpush2.msra.mxu0 0.0
        %919 = vmatprep.subr.mxu0 0.0
        %920 = vmatpush2.msra.mxu0 0.0
        %921 = vmatprep.subr.mxu0 0.0
        %922 = vmatpush2.msra.mxu0 0.0
        %923 = vmatprep.subr.mxu0 0.0
        %924 = vmatpush2.msra.mxu0 0.0
        %925 = vmatprep.subr.mxu0 0.0
        %926 = vmatpush2.msra.mxu0 0.0
        %927 = vmatprep.subr.mxu0 0.0
        %928 = vmatpush2.msra.mxu0 0.0
        %929 = vmatprep.subr.mxu0 0.0
        %930 = vmatpush2.msra.mxu0 0.0
        %931 = vmatprep.subr.mxu0 0.0
        %932 = vmatpush2.msra.mxu0 0.0
        %933 = vmatprep.subr.mxu0 0.0
        %934 = vmatpush2.msra.mxu0 0.0
        %935 = vmatprep.subr.mxu0 0.0
        %936 = vmatpush2.msra.mxu0 0.0
        %937 = vmatprep.subr.mxu0 0.0
        %938 = vmatpush2.msra.mxu0 0.0
        %939 = vmatprep.subr.mxu0 0.0
        %940 = vmatpush2.msra.mxu0 0.0
        %941 = vmatprep.mubr.f32.mxu0 0.0
        %942 = vmatmul.mubr.f32.gmra.mxu0 %v688
        %v943 = vpop.f32.mrf.mxu0
        %v944 = vadd.f32 %v557, %v943
        %v945 = vpop.f32.mrf.mxu0
        %946 = vmatprep.mubr.f32.mxu0 0.0
        %947 = vmatmul.mubr.f32.gmra.mxu0 %v691
        %v948 = vpop.f32.mrf.mxu0
        %v949 = vadd.f32 %v558, %v948
        %v950 = vpop.f32.mrf.mxu0
        %951 = vdwg.mxu0
        %v952 = vld [vmem:[%s7] sm:$0xff]
        %v953 = vld [vmem:[%s7 + $0x8] sm:$0xff]
        %v954 = vld [vmem:[%s7 + $0x10] sm:$0xff]
        %v955 = vld [vmem:[%s7 + $0x18] sm:$0xff]
        %v956 = vld [vmem:[%s8] sm:$0x1]
        %v958 = vlaneseq
        %v959 = vshrl.u32 %v958, 7
        %v960 = vsub.s32 0, %v959
        %v961 = vrot.slane %v956, %v960
        %v964 = vsel %vm515, %v944, 0
        %v967 = vsel %vm515, %v949, 0
        %969 = vmatprep.subr.mxu0 0.0
        %970 = vmatpush1.msra.mxu0 0.0
        %971 = vmatprep.subr.mxu0 0.0
        %972 = vmatpush1.msra.mxu0 0.0
        %973 = vmatprep.subr.mxu0 0.0
        %974 = vmatpush1.msra.mxu0 0.0
        %975 = vmatprep.subr.mxu0 0.0
        %976 = vmatpush1.msra.mxu0 0.0
        %977 = vmatprep.subr.mxu0 0.0
        %978 = vmatpush1.msra.mxu0 0.0
        %979 = vmatprep.subr.mxu0 0.0
        %980 = vmatpush1.msra.mxu0 0.0
        %981 = vmatprep.subr.mxu0 0.0
        %982 = vmatpush1.msra.mxu0 0.0
        %983 = vmatprep.subr.mxu0 0.0
        %984 = vmatpush1.msra.mxu0 0.0
        %985 = vmatprep.subr.mxu0 0.0
        %986 = vmatpush1.msra.mxu0 0.0
        %987 = vmatprep.subr.mxu0 0.0
        %988 = vmatpush1.msra.mxu0 0.0
        %989 = vmatprep.subr.mxu0 0.0
        %990 = vmatpush1.msra.mxu0 0.0
        %991 = vmatprep.subr.mxu0 0.0
        %992 = vmatpush1.msra.mxu0 0.0
        %993 = vmatprep.subr.mxu0 0.0
        %994 = vmatpush1.msra.mxu0 %v955
        %995 = vmatprep.subr.mxu0 0.0
        %996 = vmatpush1.msra.mxu0 %v954
        %997 = vmatprep.subr.mxu0 0.0
        %998 = vmatpush1.msra.mxu0 %v953
        %999 = vmatprep.subr.mxu0 0.0
        %1000 = vmatpush1.msra.mxu0 %v952
        %1001 = vmatprep.subr.mxu0 0.0
        %1002 = vmatpush2.msra.mxu0 0.0
        %1003 = vmatprep.subr.mxu0 0.0
        %1004 = vmatpush2.msra.mxu0 0.0
        %1005 = vmatprep.subr.mxu0 0.0
        %1006 = vmatpush2.msra.mxu0 0.0
        %1007 = vmatprep.subr.mxu0 0.0
        %1008 = vmatpush2.msra.mxu0 0.0
        %1009 = vmatprep.subr.mxu0 0.0
        %1010 = vmatpush2.msra.mxu0 0.0
        %1011 = vmatprep.subr.mxu0 0.0
        %1012 = vmatpush2.msra.mxu0 0.0
        %1013 = vmatprep.subr.mxu0 0.0
        %1014 = vmatpush2.msra.mxu0 0.0
        %1015 = vmatprep.subr.mxu0 0.0
        %1016 = vmatpush2.msra.mxu0 0.0
        %1017 = vmatprep.subr.mxu0 0.0
        %1018 = vmatpush2.msra.mxu0 0.0
        %1019 = vmatprep.subr.mxu0 0.0
        %1020 = vmatpush2.msra.mxu0 0.0
        %1021 = vmatprep.subr.mxu0 0.0
        %1022 = vmatpush2.msra.mxu0 0.0
        %1023 = vmatprep.subr.mxu0 0.0
        %1024 = vmatpush2.msra.mxu0 0.0
        %1025 = vmatprep.subr.mxu0 0.0
        %1026 = vmatpush2.msra.mxu0 0.0
        %1027 = vmatprep.subr.mxu0 0.0
        %1028 = vmatpush2.msra.mxu0 0.0
        %1029 = vmatprep.subr.mxu0 0.0
        %1030 = vmatpush2.msra.mxu0 0.0
        %1031 = vmatprep.subr.mxu0 0.0
        %1032 = vmatpush2.msra.mxu0 0.0
        %1033 = vmatprep.mubr.f32.mxu0 0.0
        %1034 = vmatmul.mubr.f32.gmra.mxu0 %v964
        %v1035 = vpop.f32.mrf.mxu0
        %v1036 = vadd.f32 %v961, %v1035
        %v1037 = vpop.f32.mrf.mxu0
        %1038 = vmatprep.mubr.f32.mxu0 0.0
        %1039 = vmatmul.mubr.f32.gmra.mxu0 %v967
        %v1040 = vpop.f32.mrf.mxu0
        %v1041 = vadd.f32 %v961, %v1040
        %v1042 = vpop.f32.mrf.mxu0
        %1043 = vdwg.mxu0
        %v1044 = vld [vmem:[%s9] sm:$0x1]
        %v1045 = vld [vmem:[%s10] sm:$0x1]
        %vm1046 = vcmask 523264
        %v1047 = vsel %vm1046, %v1036, 0.0
        %1048 = vadd.xlane.f32.xlu0 %v1047
        %v1049 = vpop.xlane.xlu0 %1048
        %v1050 = vsel %vm1046, %v1041, 0.0
        %1051 = vadd.xlane.f32.xlu0 %v1050
        %v1052 = vpop.xlane.xlu0 %1051
        %v1053 = vrcp.pop 64.0
        %v1054 = vmul.f32 %v1049, %v1053
        %v1055 = vmul.f32 %v1052, %v1053
        %v1056 = vsub.f32 %v1036, %v1054
        %v1057 = vsub.f32 %v1041, %v1055
        %v1058 = vmul.f32 %v1056, %v1056
        %v1059 = vmul.f32 %v1057, %v1057
        %v1060 = vsel %vm1046, %v1058, 0.0
        %1061 = vadd.xlane.f32.xlu0 %v1060
        %v1062 = vpop.xlane.xlu0 %1061
        %v1063 = vsel %vm1046, %v1059, 0.0
        %1064 = vadd.xlane.f32.xlu0 %v1063
        %v1065 = vpop.xlane.xlu0 %1064
        %v1066 = vmul.f32 %v1062, %v1053
        %v1067 = vmul.f32 %v1065, %v1053
        %v1068 = vadd.f32 %v1066, 1e-05
        %v1069 = vadd.f32 %v1067, 1e-05
        %v1070 = vrsqrt.pop %v1068
        %v1071 = vrsqrt.pop %v1069
        %v1072 = vmul.f32 %v1056, %v1070
        %v1073 = vmul.f32 %v1057, %v1071
        %v1075 = vlaneseq
        %v1076 = vshrl.u32 %v1075, 7
        %v1077 = vsub.s32 0, %v1076
        %v1078 = vrot.slane %v1044, %v1077
        %v1080 = vmul.f32 %v1072, %v1078
        %v1081 = vmul.f32 %v1073, %v1078
        %v1083 = vlaneseq
        %v1084 = vshrl.u32 %v1083, 7
        %v1085 = vsub.s32 0, %v1084
        %v1086 = vrot.slane %v1045, %v1085
        %v1088 = vadd.f32 %v1080, %v1086
        %v1089 = vadd.f32 %v1081, %v1086
        %v1090 = vmax.f32 %v1088, 0.0
        %v1091 = vmax.f32 %v1089, 0.0
        %v1092 = vld [vmem:[%s11] sm:$0xff]
        %v1093 = vld [vmem:[%s11 + $0x8] sm:$0xff]
        %v1094 = vld [vmem:[%s11 + $0x10] sm:$0xff]
        %v1095 = vld [vmem:[%s11 + $0x18] sm:$0xff]
        %v1096 = vld [vmem:[%s11 + $0x20] sm:$0xff]
        %v1097 = vld [vmem:[%s11 + $0x28] sm:$0xff]
        %v1098 = vld [vmem:[%s11 + $0x30] sm:$0xff]
        %v1099 = vld [vmem:[%s11 + $0x38] sm:$0xff]
        %v1100 = vld [vmem:[%s12] sm:$0x1]
        %v1102 = vlaneseq
        %v1103 = vshrl.u32 %v1102, 7
        %v1104 = vsub.s32 0, %v1103
        %v1105 = vrot.slane %v1100, %v1104
        %v1108 = vsel %vm1046, %v1090, 0
        %v1111 = vsel %vm1046, %v1091, 0
        %1113 = vmatprep.subr.mxu0 0.0
        %1114 = vmatpush1.msra.mxu0 0.0
        %1115 = vmatprep.subr.mxu0 0.0
        %1116 = vmatpush1.msra.mxu0 0.0
        %1117 = vmatprep.subr.mxu0 0.0
        %1118 = vmatpush1.msra.mxu0 0.0
        %1119 = vmatprep.subr.mxu0 0.0
        %1120 = vmatpush1.msra.mxu0 0.0
        %1121 = vmatprep.subr.mxu0 0.0
        %1122 = vmatpush1.msra.mxu0 0.0
        %1123 = vmatprep.subr.mxu0 0.0
        %1124 = vmatpush1.msra.mxu0 0.0
        %1125 = vmatprep.subr.mxu0 0.0
        %1126 = vmatpush1.msra.mxu0 0.0
        %1127 = vmatprep.subr.mxu0 0.0
        %1128 = vmatpush1.msra.mxu0 0.0
        %1129 = vmatprep.subr.mxu0 0.0
        %1130 = vmatpush1.msra.mxu0 %v1099
        %1131 = vmatprep.subr.mxu0 0.0
        %1132 = vmatpush1.msra.mxu0 %v1098
        %1133 = vmatprep.subr.mxu0 0.0
        %1134 = vmatpush1.msra.mxu0 %v1097
        %1135 = vmatprep.subr.mxu0 0.0
        %1136 = vmatpush1.msra.mxu0 %v1096
        %1137 = vmatprep.subr.mxu0 0.0
        %1138 = vmatpush1.msra.mxu0 %v1095
        %1139 = vmatprep.subr.mxu0 0.0
        %1140 = vmatpush1.msra.mxu0 %v1094
        %1141 = vmatprep.subr.mxu0 0.0
        %1142 = vmatpush1.msra.mxu0 %v1093
        %1143 = vmatprep.subr.mxu0 0.0
        %1144 = vmatpush1.msra.mxu0 %v1092
        %1145 = vmatprep.subr.mxu0 0.0
        %1146 = vmatpush2.msra.mxu0 0.0
        %1147 = vmatprep.subr.mxu0 0.0
        %1148 = vmatpush2.msra.mxu0 0.0
        %1149 = vmatprep.subr.mxu0 0.0
        %1150 = vmatpush2.msra.mxu0 0.0
        %1151 = vmatprep.subr.mxu0 0.0
        %1152 = vmatpush2.msra.mxu0 0.0
        %1153 = vmatprep.subr.mxu0 0.0
        %1154 = vmatpush2.msra.mxu0 0.0
        %1155 = vmatprep.subr.mxu0 0.0
        %1156 = vmatpush2.msra.mxu0 0.0
        %1157 = vmatprep.subr.mxu0 0.0
        %1158 = vmatpush2.msra.mxu0 0.0
        %1159 = vmatprep.subr.mxu0 0.0
        %1160 = vmatpush2.msra.mxu0 0.0
        %1161 = vmatprep.subr.mxu0 0.0
        %1162 = vmatpush2.msra.mxu0 0.0
        %1163 = vmatprep.subr.mxu0 0.0
        %1164 = vmatpush2.msra.mxu0 0.0
        %1165 = vmatprep.subr.mxu0 0.0
        %1166 = vmatpush2.msra.mxu0 0.0
        %1167 = vmatprep.subr.mxu0 0.0
        %1168 = vmatpush2.msra.mxu0 0.0
        %1169 = vmatprep.subr.mxu0 0.0
        %1170 = vmatpush2.msra.mxu0 0.0
        %1171 = vmatprep.subr.mxu0 0.0
        %1172 = vmatpush2.msra.mxu0 0.0
        %1173 = vmatprep.subr.mxu0 0.0
        %1174 = vmatpush2.msra.mxu0 0.0
        %1175 = vmatprep.subr.mxu0 0.0
        %1176 = vmatpush2.msra.mxu0 0.0
        %1177 = vmatprep.mubr.f32.mxu0 0.0
        %1178 = vmatmul.mubr.f32.gmra.mxu0 %v1108
        %v1179 = vpop.f32.mrf.mxu0
        %v1180 = vadd.f32 %v1105, %v1179
        %v1181 = vpop.f32.mrf.mxu0
        %1182 = vmatprep.mubr.f32.mxu0 0.0
        %1183 = vmatmul.mubr.f32.gmra.mxu0 %v1111
        %v1184 = vpop.f32.mrf.mxu0
        %v1185 = vadd.f32 %v1105, %v1184
        %v1186 = vpop.f32.mrf.mxu0
        %1187 = vdwg.mxu0
        %v1188 = vadd.f32 %v501, %v1180
        %v1189 = vadd.f32 %v502, %v1185
        %1190 = vst.msk [vmem:[%s480] sm:$0xff] %vm515, %v1188
        %1191 = vst.msk [vmem:[%s480 + $0x8] sm:$0xff] %vm515, %v1189
        %s1192 = sand.u32 %s330, 1
        %s1193 = scalar_lea.sflag [#allocation4], %s1192
        %s1194 = sand.u32 %s330, 1
        %s1195 = smul.addr %s1194, 16
        %s1196 = scalar_lea.vmem [#allocation3], %s1195
        // Predicated region
        $region73: #{tpu_custom_call.1} parent=71 // pred_check
          %p1197 = pneg %p340
        $region74: #{tpu_custom_call.1} parent=71 // pred_check_branch
          %1199 = sbr.rel (%p1197) target = $region76
        $region75: #{tpu_custom_call.1} parent=71 // pred_region
          %s1201 = ssub.s32 256, 256
          %1202 = vsyncadd %s1193, %s1201
          %s1203 = smul.addr %s29, 2
          %s1204 = smul.addr %s1203, 128
          %s1205 = scalar_lea.hbm %s13, %s1204
          %s1206 = sshll.u32 %s1196, 4
          %s1207 = int_to_ptr.vmem [resolvable:$true] %s1206
          %1212 = dma.vmem_to_hbm [thread:$0]  %s1207, 256, %s1205, %s1193, 128, 128, 8
        $region76: #{tpu_custom_call.1} parent=71 // pred_fallthru
          _
      $region72: #{tpu_custom_call.1} parent=5 // pred_fallthru
        _
      %p1213 = scmp.le.s32.totalorder 2, %s24
      // Predicated region
      $region77: #{tpu_custom_call.1} parent=5 // pred_check
        %p1214 = pneg %p1213
      $region78: #{tpu_custom_call.1} parent=5 // pred_check_branch
        %1216 = sbr.rel (%p1214) target = $region80
      $region79: #{tpu_custom_call.1} parent=5 // pred_region
        %s1217 = ssub.s32 %s24, 2
        // Predicated region
        $region81: #{tpu_custom_call.1} parent=79 // pred_check
          %p1218 = pneg %p346
        $region82: #{tpu_custom_call.1} parent=79 // pred_check_branch
          %1220 = sbr.rel (%p1218) target = $region84
        $region83: #{tpu_custom_call.1} parent=79 // pred_region
          %s1221 = sand.u32 %s331, 1
          %s1222 = scalar_lea.sflag [#allocation4], %s1221
          %s1223 = sand.u32 %s331, 1
          %s1224 = smul.addr %s1223, 16
          %s1225 = scalar_lea.vmem [#allocation3], %s1224
          %1226 = dma.done %s1222, 256
        $region84: #{tpu_custom_call.1} parent=79 // pred_fallthru
          _
      $region80: #{tpu_custom_call.1} parent=5 // pred_fallthru
        _
    $region6: #{tpu_custom_call.1} parent=1 // loop_footer
      %s28 = sadd.s32 1, %s24
    $region7: #{tpu_custom_call.1} parent=1 // loop_footer_branch
      %23 = sbr.rel target = $region3
    $region8: #{tpu_custom_call.1} parent=1 // loop_exit
      _
    %1227 = vsyncpa [#allocation4], 1
    %s1228 = scalar_lea.sflag [#allocation4], 1
    %1229 = vsyncpa %s1228, 1

</llo_original>
